<compile_context>
chip_gen: v5e
topology: v5e:2x2
jax: 0.10.0
libtpu: 0.0.40
codegen_flags: <defaults>
</compile_context>

<pallas_src>
import jax
import jax.numpy as jnp
from jax.experimental import pallas as pl
from jax.experimental.pallas import tpu as pltpu

LANE = 128


def lstm_tagger_kernel(x_ref, wih_ref, whh_ref, wa_ref, ba_ref, wt_ref, bt_ref,
                       out_ref, hseq_ref):
    """All refs in VMEM.

    x_ref   : (TB, S, E)   bf16  embedded tokens (batch-major tile)
    wih_ref : (E, 4U)      bf16  LSTM input weights, gate order [i|f|g|o] (W_ih^T)
    whh_ref : (U, 4U)      bf16  LSTM recurrent weights (W_hh^T)
    wa_ref  : (U, Rp)      bf16  attn Linear weight^T, lane-padded to Rp=128
    ba_ref  : (1, Rp)      f32   attn bias (zero in padded lanes)
    wt_ref  : (Rp, Cp)     bf16  tagger Linear weight^T, padded to 128x128
    bt_ref  : (1, Cp)      f32   tagger bias (zero in padded lanes)
    out_ref : (TB, S, Cp)  f32   padded logits
    hseq_ref: (TB, S, U)   f32   scratch holding all hidden states
    """
    TB, S, E = x_ref.shape
    U = whh_ref.shape[0]
    Cp = out_ref.shape[-1]

    # ---- 1) LSTM input projection for ALL TB*S rows in a single MXU contraction ----
    x2d = x_ref[...].reshape(TB * S, E)                                    # (TB*S, E) bf16
    gx = jnp.dot(x2d, wih_ref[...], preferred_element_type=jnp.float32)   # (TB*S, 4U) f32
    gx3 = gx.reshape(TB, S, 4 * U)

    whh = whh_ref[...]                                                     # (U, 4U) bf16

    def sigmoid(z):
        return 1.0 / (1.0 + jnp.exp(-z))

    # ---- 2) recurrence (inherently serial over t; S is small and static) ----
    h = jnp.zeros((TB, U), jnp.float32)   # PyTorch default h0 = 0
    c = jnp.zeros((TB, U), jnp.float32)   # PyTorch default c0 = 0
    for t in range(S):
        gates = gx3[:, t, :] + jnp.dot(h.astype(whh.dtype), whh,
                                       preferred_element_type=jnp.float32)  # (TB, 4U) f32
        i_g = sigmoid(gates[:, 0 * U:1 * U])
        f_g = sigmoid(gates[:, 1 * U:2 * U])
        g_g = jnp.tanh(gates[:, 2 * U:3 * U])
        o_g = sigmoid(gates[:, 3 * U:4 * U])
        c = f_g * c + i_g * g_g
        h = o_g * jnp.tanh(c)
        hseq_ref[:, pl.ds(t, 1), :] = h.reshape(TB, 1, U)

    # ---- 3) attn + tagger linears, batched over all TB*S rows, lane-padded outputs ----
    Hf = hseq_ref[...].reshape(TB * S, U).astype(wa_ref.dtype)             # (TB*S, U) bf16
    A = jnp.dot(Hf, wa_ref[...], preferred_element_type=jnp.float32) + ba_ref[...]
    logits = jnp.dot(A.astype(wt_ref.dtype), wt_ref[...],
                     preferred_element_type=jnp.float32) + bt_ref[...]     # (TB*S, Cp)

    # single full-block unmasked store
    out_ref[...] = logits.reshape(TB, S, Cp)


def lstm_tagger_forward(words, kparams, *, tb=1):
    """words: (S, B) int32 token ids (time-major, like the PyTorch nn.LSTM input).

    Returns logits of shape (S*B, C) with PyTorch's H.view(-1, U) row ordering (row = t*B + b).
    """
    S, B = words.shape
    E = kparams["embed"].shape[1]
    U = kparams["whh"].shape[0]
    Cp = kparams["wt"].shape[1]
    C = kparams["tagset_size"]
    assert B % tb == 0, "batch must be divisible by the batch tile"

    # TODO(synk): embedding gather (jnp.take) left in plain JAX glue; a manual DMA-gather
    # kernel is not worthwhile at these sizes.
    x = jnp.take(kparams["embed"], words, axis=0)            # (S, B, E) f32
    x = jnp.transpose(x, (1, 0, 2)).astype(jnp.bfloat16)     # (B, S, E) bf16, batch-major

    out = pl.pallas_call(
        lstm_tagger_kernel,
        out_shape=jax.ShapeDtypeStruct((B, S, Cp), jnp.float32),
        grid=(B // tb,),
        in_specs=[
            pl.BlockSpec((tb, S, E), lambda b: (b, 0, 0)),
            pl.BlockSpec(kparams["wih"].shape, lambda b: (0, 0)),
            pl.BlockSpec(kparams["whh"].shape, lambda b: (0, 0)),
            pl.BlockSpec(kparams["wa"].shape, lambda b: (0, 0)),
            pl.BlockSpec(kparams["ba"].shape, lambda b: (0, 0)),
            pl.BlockSpec(kparams["wt"].shape, lambda b: (0, 0)),
            pl.BlockSpec(kparams["bt"].shape, lambda b: (0, 0)),
        ],
        out_specs=pl.BlockSpec((tb, S, Cp), lambda b: (b, 0, 0)),
        scratch_shapes=[pltpu.VMEM((tb, S, U), jnp.float32)],
        compiler_params=pltpu.CompilerParams(
            dimension_semantics=("parallel",)),   # batch tiles shard across v7x's 2 TCs
    )(x, kparams["wih"], kparams["whh"], kparams["wa"], kparams["ba"],
      kparams["wt"], kparams["bt"])

    # (B, S, Cp) -> PyTorch row order (t*B + b), then strip the lane padding.
    out = jnp.transpose(out, (1, 0, 2)).reshape(S * B, Cp)
    return out[:, :C]


def init_params(key, V, E, U, R, C):
    """Synthetic f32 parameters in 'math' layout (already transposed: y = x @ W + b)."""
    ks = jax.random.split(key, 7)
    return {
        "embed": jax.random.normal(ks[0], (V, E), jnp.float32) * 0.1,
        # nn.LSTM(E, U, bias=False): weight_ih_l0 (4U,E), weight_hh_l0 (4U,U), gates [i|f|g|o]
        "wih": jax.random.normal(ks[1], (E, 4 * U), jnp.float32) * 0.1,
        "whh": jax.random.normal(ks[2], (U, 4 * U), jnp.float32) * 0.1,
        # attn: Linear(U, R); tagger: Linear(R, C)
        "wa": jax.random.normal(ks[3], (U, R), jnp.float32) * 0.1,
        "ba": jax.random.normal(ks[4], (1, R), jnp.float32) * 0.01,
        "wt": jax.random.normal(ks[5], (R, C), jnp.float32) * 0.1,
        "bt": jax.random.normal(ks[6], (1, C), jnp.float32) * 0.01,
    }


def prepare_kernel_params(raw):
    """Zero-pad r / tagset lane dims to 128 and cast MXU operands to bf16."""
    U = raw["whh"].shape[0]
    R = raw["wa"].shape[1]
    C = raw["wt"].shape[1]
    Rp = ((R + LANE - 1) // LANE) * LANE
    Cp = ((C + LANE - 1) // LANE) * LANE
    wa_p = jnp.zeros((U, Rp), jnp.float32).at[:, :R].set(raw["wa"])
    ba_p = jnp.zeros((1, Rp), jnp.float32).at[:, :R].set(raw["ba"])
    wt_p = jnp.zeros((Rp, Cp), jnp.float32).at[:R, :C].set(raw["wt"])
    bt_p = jnp.zeros((1, Cp), jnp.float32).at[:, :C].set(raw["bt"])
    return {
        "embed": raw["embed"],                      # f32, gather stays in JAX
        "wih": raw["wih"].astype(jnp.bfloat16),
        "whh": raw["whh"].astype(jnp.bfloat16),
        "wa": wa_p.astype(jnp.bfloat16),
        "ba": ba_p,                                 # biases kept f32 (VPU adds in f32)
        "wt": wt_p.astype(jnp.bfloat16),
        "bt": bt_p,
        "tagset_size": C,
    }


def reference_forward(words, raw):
    """Pure-JAX f32 reference of LSTMTagger.forward (for correctness checking)."""
    S, B = words.shape
    U = raw["whh"].shape[0]
    x = jnp.take(raw["embed"], words, axis=0)                 # (S, B, E)
    h = jnp.zeros((B, U), jnp.float32)
    c = jnp.zeros((B, U), jnp.float32)
    hs = []
    for t in range(S):
        gates = x[t] @ raw["wih"] + h @ raw["whh"]
        i = jax.nn.sigmoid(gates[:, 0 * U:1 * U])
        f = jax.nn.sigmoid(gates[:, 1 * U:2 * U])
        g = jnp.tanh(gates[:, 2 * U:3 * U])
        o = jax.nn.sigmoid(gates[:, 3 * U:4 * U])
        c = f * c + i * g
        h = o * jnp.tanh(c)
        hs.append(h)
    H = jnp.stack(hs, axis=0)                                 # (S, B, U)
    Hf = H.reshape(S * B, U)                                  # == H.contiguous().view(-1, U)
    A = Hf @ raw["wa"] + raw["ba"]
    return A @ raw["wt"] + raw["bt"]                          # (S*B, C)


if __name__ == "__main__":
    V, E, U, R, C = 50, 32, 32, 16, 5   # vocab, embed_dim, lstm_dim, r, tagset_size
    S, B = 8, 2                         # seq_len (multiple of 8 for full sublanes), batch

    key = jax.random.PRNGKey(0)
    k_param, k_words = jax.random.split(key)
    raw = init_params(k_param, V, E, U, R, C)
    kparams = prepare_kernel_params(raw)
    words = jax.random.randint(k_words, (S, B), 0, V, dtype=jnp.int32)  # (S, B) like torch

    logits = lstm_tagger_forward(words, kparams, tb=1)
    logits = jax.block_until_ready(logits)
    assert logits.shape == (S * B, C) and logits.dtype == jnp.float32

    ref = reference_forward(words, raw)
    assert jnp.allclose(logits, ref, atol=5e-3, rtol=5e-2), "kernel/reference mismatch"

    print("KERNEL_OK")
</pallas_src>

<mosaic_0001>
module attributes {stable_mosaic.version = 11 : i64} {
  func.func @lstm_tagger_kernel(%arg0: i32, %arg1: memref<1x8x32xbf16, #tpu.memory_space<vmem>>, %arg2: memref<32x128xbf16, #tpu.memory_space<vmem>>, %arg3: memref<32x128xbf16, #tpu.memory_space<vmem>>, %arg4: memref<32x128xbf16, #tpu.memory_space<vmem>>, %arg5: memref<1x128xf32, #tpu.memory_space<vmem>>, %arg6: memref<128x128xbf16, #tpu.memory_space<vmem>>, %arg7: memref<1x128xf32, #tpu.memory_space<vmem>>, %arg8: memref<1x8x128xf32, #tpu.memory_space<vmem>>, %arg9: memref<1x8x32xf32, #tpu.memory_space<vmem>>) attributes {dimension_semantics = [#tpu.dimension_semantics<parallel>], iteration_bounds = array<i64: 2>, scalar_prefetch = 0 : i64, scratch_operands = 1 : i64, tpu.core_type = #tpu.core_type<tc>, window_params = [{transform_indices = @transform_0, window_bounds = array<i64: 1, 8, 32>}, {pipeline_mode = #tpu.pipeline_mode<synchronous>, transform_indices = @transform_1, window_bounds = array<i64: 32, 128>}, {pipeline_mode = #tpu.pipeline_mode<synchronous>, transform_indices = @transform_2, window_bounds = array<i64: 32, 128>}, {pipeline_mode = #tpu.pipeline_mode<synchronous>, transform_indices = @transform_3, window_bounds = array<i64: 32, 128>}, {pipeline_mode = #tpu.pipeline_mode<synchronous>, transform_indices = @transform_4, window_bounds = array<i64: 1, 128>}, {pipeline_mode = #tpu.pipeline_mode<synchronous>, transform_indices = @transform_5, window_bounds = array<i64: 128, 128>}, {pipeline_mode = #tpu.pipeline_mode<synchronous>, transform_indices = @transform_6, window_bounds = array<i64: 1, 128>}, {transform_indices = @transform_7, window_bounds = array<i64: 1, 8, 128>}]} {
    %c0 = arith.constant 0 : index
    %c0_0 = arith.constant 0 : index
    %c0_1 = arith.constant 0 : index
    %0 = vector.load %arg1[%c0, %c0_0, %c0_1] : memref<1x8x32xbf16, #tpu.memory_space<vmem>>, vector<1x8x32xbf16>
    %1 = vector.shape_cast %0 : vector<1x8x32xbf16> to vector<8x32xbf16>
    %c0_2 = arith.constant 0 : index
    %c0_3 = arith.constant 0 : index
    %2 = vector.load %arg2[%c0_2, %c0_3] : memref<32x128xbf16, #tpu.memory_space<vmem>>, vector<32x128xbf16>
    %cst = arith.constant dense<0.000000e+00> : vector<8x128xf32>
    %3 = tpu.matmul %1, %2, %cst {dimension_numbers = #tpu.dot_dimension_numbers<[1], [0], [0], [1], [0, 0, 1, 1], [], []>} : vector<8x32xbf16>, vector<32x128xbf16>, vector<8x128xf32> -> vector<8x128xf32>
    %4 = vector.shape_cast %3 : vector<8x128xf32> to vector<1x8x128xf32>
    %c0_4 = arith.constant 0 : index
    %c0_5 = arith.constant 0 : index
    %5 = vector.load %arg3[%c0_4, %c0_5] : memref<32x128xbf16, #tpu.memory_space<vmem>>, vector<32x128xbf16>
    %cst_6 = arith.constant 0.000000e+00 : f32
    %6 = vector.broadcast %cst_6 : f32 to vector<1x32xf32>
    %cst_7 = arith.constant 0.000000e+00 : f32
    %7 = vector.broadcast %cst_7 : f32 to vector<1x32xf32>
    %8 = vector.extract_strided_slice %4 {offsets = [0, 0, 0], sizes = [1, 1, 128], strides = [1, 1, 1]} : vector<1x8x128xf32> to vector<1x1x128xf32>
    %9 = vector.shape_cast %8 : vector<1x1x128xf32> to vector<1x128xf32>
    %10 = arith.truncf %6 : vector<1x32xf32> to vector<1x32xbf16>
    %cst_8 = arith.constant dense<0.000000e+00> : vector<1x128xf32>
    %11 = tpu.matmul %10, %5, %cst_8 {dimension_numbers = #tpu.dot_dimension_numbers<[1], [0], [0], [1], [0, 0, 1, 1], [], []>} : vector<1x32xbf16>, vector<32x128xbf16>, vector<1x128xf32> -> vector<1x128xf32>
    %12 = arith.addf %9, %11 : vector<1x128xf32>
    %13 = vector.extract_strided_slice %12 {offsets = [0, 0], sizes = [1, 32], strides = [1, 1]} : vector<1x128xf32> to vector<1x32xf32>
    %cst_9 = arith.constant 0.000000e+00 : f32
    %14 = vector.broadcast %cst_9 : f32 to vector<1x32xf32>
    %15 = arith.subf %14, %13 : vector<1x32xf32>
    %16 = math.exp %15 : vector<1x32xf32>
    %cst_10 = arith.constant 1.000000e+00 : f32
    %17 = vector.broadcast %cst_10 : f32 to vector<1x32xf32>
    %18 = arith.addf %17, %16 : vector<1x32xf32>
    %cst_11 = arith.constant 1.000000e+00 : f32
    %19 = vector.broadcast %cst_11 : f32 to vector<1x32xf32>
    %20 = arith.divf %19, %18 : vector<1x32xf32>
    %21 = vector.extract_strided_slice %12 {offsets = [0, 32], sizes = [1, 32], strides = [1, 1]} : vector<1x128xf32> to vector<1x32xf32>
    %cst_12 = arith.constant 0.000000e+00 : f32
    %22 = vector.broadcast %cst_12 : f32 to vector<1x32xf32>
    %23 = arith.subf %22, %21 : vector<1x32xf32>
    %24 = math.exp %23 : vector<1x32xf32>
    %cst_13 = arith.constant 1.000000e+00 : f32
    %25 = vector.broadcast %cst_13 : f32 to vector<1x32xf32>
    %26 = arith.addf %25, %24 : vector<1x32xf32>
    %cst_14 = arith.constant 1.000000e+00 : f32
    %27 = vector.broadcast %cst_14 : f32 to vector<1x32xf32>
    %28 = arith.divf %27, %26 : vector<1x32xf32>
    %29 = vector.extract_strided_slice %12 {offsets = [0, 64], sizes = [1, 32], strides = [1, 1]} : vector<1x128xf32> to vector<1x32xf32>
    %30 = math.tanh %29 : vector<1x32xf32>
    %31 = vector.extract_strided_slice %12 {offsets = [0, 96], sizes = [1, 32], strides = [1, 1]} : vector<1x128xf32> to vector<1x32xf32>
    %cst_15 = arith.constant 0.000000e+00 : f32
    %32 = vector.broadcast %cst_15 : f32 to vector<1x32xf32>
    %33 = arith.subf %32, %31 : vector<1x32xf32>
    %34 = math.exp %33 : vector<1x32xf32>
    %cst_16 = arith.constant 1.000000e+00 : f32
    %35 = vector.broadcast %cst_16 : f32 to vector<1x32xf32>
    %36 = arith.addf %35, %34 : vector<1x32xf32>
    %cst_17 = arith.constant 1.000000e+00 : f32
    %37 = vector.broadcast %cst_17 : f32 to vector<1x32xf32>
    %38 = arith.divf %37, %36 : vector<1x32xf32>
    %39 = arith.mulf %28, %7 : vector<1x32xf32>
    %40 = arith.mulf %20, %30 : vector<1x32xf32>
    %41 = arith.addf %39, %40 : vector<1x32xf32>
    %42 = math.tanh %41 : vector<1x32xf32>
    %43 = arith.mulf %38, %42 : vector<1x32xf32>
    %44 = vector.shape_cast %43 : vector<1x32xf32> to vector<1x1x32xf32>
    %c0_18 = arith.constant 0 : index
    %c0_19 = arith.constant 0 : index
    %c0_20 = arith.constant 0 : index
    %45 = vector.load %arg9[%c0_18, %c0_19, %c0_20] : memref<1x8x32xf32, #tpu.memory_space<vmem>>, vector<1x1x32xf32>
    tpu.vector_store %arg9[%c0_18, %c0_19, %c0_20], %44 {strides = array<i32>} : memref<1x8x32xf32, #tpu.memory_space<vmem>>, vector<1x1x32xf32>,
    %46 = vector.extract_strided_slice %4 {offsets = [0, 1, 0], sizes = [1, 1, 128], strides = [1, 1, 1]} : vector<1x8x128xf32> to vector<1x1x128xf32>
    %47 = vector.shape_cast %46 : vector<1x1x128xf32> to vector<1x128xf32>
    %48 = arith.truncf %43 : vector<1x32xf32> to vector<1x32xbf16>
    %cst_21 = arith.constant dense<0.000000e+00> : vector<1x128xf32>
    %49 = tpu.matmul %48, %5, %cst_21 {dimension_numbers = #tpu.dot_dimension_numbers<[1], [0], [0], [1], [0, 0, 1, 1], [], []>} : vector<1x32xbf16>, vector<32x128xbf16>, vector<1x128xf32> -> vector<1x128xf32>
    %50 = arith.addf %47, %49 : vector<1x128xf32>
    %51 = vector.extract_strided_slice %50 {offsets = [0, 0], sizes = [1, 32], strides = [1, 1]} : vector<1x128xf32> to vector<1x32xf32>
    %cst_22 = arith.constant 0.000000e+00 : f32
    %52 = vector.broadcast %cst_22 : f32 to vector<1x32xf32>
    %53 = arith.subf %52, %51 : vector<1x32xf32>
    %54 = math.exp %53 : vector<1x32xf32>
    %cst_23 = arith.constant 1.000000e+00 : f32
    %55 = vector.broadcast %cst_23 : f32 to vector<1x32xf32>
    %56 = arith.addf %55, %54 : vector<1x32xf32>
    %cst_24 = arith.constant 1.000000e+00 : f32
    %57 = vector.broadcast %cst_24 : f32 to vector<1x32xf32>
    %58 = arith.divf %57, %56 : vector<1x32xf32>
    %59 = vector.extract_strided_slice %50 {offsets = [0, 32], sizes = [1, 32], strides = [1, 1]} : vector<1x128xf32> to vector<1x32xf32>
    %cst_25 = arith.constant 0.000000e+00 : f32
    %60 = vector.broadcast %cst_25 : f32 to vector<1x32xf32>
    %61 = arith.subf %60, %59 : vector<1x32xf32>
    %62 = math.exp %61 : vector<1x32xf32>
    %cst_26 = arith.constant 1.000000e+00 : f32
    %63 = vector.broadcast %cst_26 : f32 to vector<1x32xf32>
    %64 = arith.addf %63, %62 : vector<1x32xf32>
    %cst_27 = arith.constant 1.000000e+00 : f32
    %65 = vector.broadcast %cst_27 : f32 to vector<1x32xf32>
    %66 = arith.divf %65, %64 : vector<1x32xf32>
    %67 = vector.extract_strided_slice %50 {offsets = [0, 64], sizes = [1, 32], strides = [1, 1]} : vector<1x128xf32> to vector<1x32xf32>
    %68 = math.tanh %67 : vector<1x32xf32>
    %69 = vector.extract_strided_slice %50 {offsets = [0, 96], sizes = [1, 32], strides = [1, 1]} : vector<1x128xf32> to vector<1x32xf32>
    %cst_28 = arith.constant 0.000000e+00 : f32
    %70 = vector.broadcast %cst_28 : f32 to vector<1x32xf32>
    %71 = arith.subf %70, %69 : vector<1x32xf32>
    %72 = math.exp %71 : vector<1x32xf32>
    %cst_29 = arith.constant 1.000000e+00 : f32
    %73 = vector.broadcast %cst_29 : f32 to vector<1x32xf32>
    %74 = arith.addf %73, %72 : vector<1x32xf32>
    %cst_30 = arith.constant 1.000000e+00 : f32
    %75 = vector.broadcast %cst_30 : f32 to vector<1x32xf32>
    %76 = arith.divf %75, %74 : vector<1x32xf32>
    %77 = arith.mulf %66, %41 : vector<1x32xf32>
    %78 = arith.mulf %58, %68 : vector<1x32xf32>
    %79 = arith.addf %77, %78 : vector<1x32xf32>
    %80 = math.tanh %79 : vector<1x32xf32>
    %81 = arith.mulf %76, %80 : vector<1x32xf32>
    %82 = vector.shape_cast %81 : vector<1x32xf32> to vector<1x1x32xf32>
    %c0_31 = arith.constant 0 : index
    %c1 = arith.constant 1 : index
    %c0_32 = arith.constant 0 : index
    %83 = vector.load %arg9[%c0_31, %c1, %c0_32] : memref<1x8x32xf32, #tpu.memory_space<vmem>>, vector<1x1x32xf32>
    tpu.vector_store %arg9[%c0_31, %c1, %c0_32], %82 {strides = array<i32>} : memref<1x8x32xf32, #tpu.memory_space<vmem>>, vector<1x1x32xf32>,
    %84 = vector.extract_strided_slice %4 {offsets = [0, 2, 0], sizes = [1, 1, 128], strides = [1, 1, 1]} : vector<1x8x128xf32> to vector<1x1x128xf32>
    %85 = vector.shape_cast %84 : vector<1x1x128xf32> to vector<1x128xf32>
    %86 = arith.truncf %81 : vector<1x32xf32> to vector<1x32xbf16>
    %cst_33 = arith.constant dense<0.000000e+00> : vector<1x128xf32>
    %87 = tpu.matmul %86, %5, %cst_33 {dimension_numbers = #tpu.dot_dimension_numbers<[1], [0], [0], [1], [0, 0, 1, 1], [], []>} : vector<1x32xbf16>, vector<32x128xbf16>, vector<1x128xf32> -> vector<1x128xf32>
    %88 = arith.addf %85, %87 : vector<1x128xf32>
    %89 = vector.extract_strided_slice %88 {offsets = [0, 0], sizes = [1, 32], strides = [1, 1]} : vector<1x128xf32> to vector<1x32xf32>
    %cst_34 = arith.constant 0.000000e+00 : f32
    %90 = vector.broadcast %cst_34 : f32 to vector<1x32xf32>
    %91 = arith.subf %90, %89 : vector<1x32xf32>
    %92 = math.exp %91 : vector<1x32xf32>
    %cst_35 = arith.constant 1.000000e+00 : f32
    %93 = vector.broadcast %cst_35 : f32 to vector<1x32xf32>
    %94 = arith.addf %93, %92 : vector<1x32xf32>
    %cst_36 = arith.constant 1.000000e+00 : f32
    %95 = vector.broadcast %cst_36 : f32 to vector<1x32xf32>
    %96 = arith.divf %95, %94 : vector<1x32xf32>
    %97 = vector.extract_strided_slice %88 {offsets = [0, 32], sizes = [1, 32], strides = [1, 1]} : vector<1x128xf32> to vector<1x32xf32>
    %cst_37 = arith.constant 0.000000e+00 : f32
    %98 = vector.broadcast %cst_37 : f32 to vector<1x32xf32>
    %99 = arith.subf %98, %97 : vector<1x32xf32>
    %100 = math.exp %99 : vector<1x32xf32>
    %cst_38 = arith.constant 1.000000e+00 : f32
    %101 = vector.broadcast %cst_38 : f32 to vector<1x32xf32>
    %102 = arith.addf %101, %100 : vector<1x32xf32>
    %cst_39 = arith.constant 1.000000e+00 : f32
    %103 = vector.broadcast %cst_39 : f32 to vector<1x32xf32>
    %104 = arith.divf %103, %102 : vector<1x32xf32>
    %105 = vector.extract_strided_slice %88 {offsets = [0, 64], sizes = [1, 32], strides = [1, 1]} : vector<1x128xf32> to vector<1x32xf32>
    %106 = math.tanh %105 : vector<1x32xf32>
    %107 = vector.extract_strided_slice %88 {offsets = [0, 96], sizes = [1, 32], strides = [1, 1]} : vector<1x128xf32> to vector<1x32xf32>
    %cst_40 = arith.constant 0.000000e+00 : f32
    %108 = vector.broadcast %cst_40 : f32 to vector<1x32xf32>
    %109 = arith.subf %108, %107 : vector<1x32xf32>
    %110 = math.exp %109 : vector<1x32xf32>
    %cst_41 = arith.constant 1.000000e+00 : f32
    %111 = vector.broadcast %cst_41 : f32 to vector<1x32xf32>
    %112 = arith.addf %111, %110 : vector<1x32xf32>
    %cst_42 = arith.constant 1.000000e+00 : f32
    %113 = vector.broadcast %cst_42 : f32 to vector<1x32xf32>
    %114 = arith.divf %113, %112 : vector<1x32xf32>
    %115 = arith.mulf %104, %79 : vector<1x32xf32>
    %116 = arith.mulf %96, %106 : vector<1x32xf32>
    %117 = arith.addf %115, %116 : vector<1x32xf32>
    %118 = math.tanh %117 : vector<1x32xf32>
    %119 = arith.mulf %114, %118 : vector<1x32xf32>
    %120 = vector.shape_cast %119 : vector<1x32xf32> to vector<1x1x32xf32>
    %c0_43 = arith.constant 0 : index
    %c2 = arith.constant 2 : index
    %c0_44 = arith.constant 0 : index
    %121 = vector.load %arg9[%c0_43, %c2, %c0_44] : memref<1x8x32xf32, #tpu.memory_space<vmem>>, vector<1x1x32xf32>
    tpu.vector_store %arg9[%c0_43, %c2, %c0_44], %120 {strides = array<i32>} : memref<1x8x32xf32, #tpu.memory_space<vmem>>, vector<1x1x32xf32>,
    %122 = vector.extract_strided_slice %4 {offsets = [0, 3, 0], sizes = [1, 1, 128], strides = [1, 1, 1]} : vector<1x8x128xf32> to vector<1x1x128xf32>
    %123 = vector.shape_cast %122 : vector<1x1x128xf32> to vector<1x128xf32>
    %124 = arith.truncf %119 : vector<1x32xf32> to vector<1x32xbf16>
    %cst_45 = arith.constant dense<0.000000e+00> : vector<1x128xf32>
    %125 = tpu.matmul %124, %5, %cst_45 {dimension_numbers = #tpu.dot_dimension_numbers<[1], [0], [0], [1], [0, 0, 1, 1], [], []>} : vector<1x32xbf16>, vector<32x128xbf16>, vector<1x128xf32> -> vector<1x128xf32>
    %126 = arith.addf %123, %125 : vector<1x128xf32>
    %127 = vector.extract_strided_slice %126 {offsets = [0, 0], sizes = [1, 32], strides = [1, 1]} : vector<1x128xf32> to vector<1x32xf32>
    %cst_46 = arith.constant 0.000000e+00 : f32
    %128 = vector.broadcast %cst_46 : f32 to vector<1x32xf32>
    %129 = arith.subf %128, %127 : vector<1x32xf32>
    %130 = math.exp %129 : vector<1x32xf32>
    %cst_47 = arith.constant 1.000000e+00 : f32
    %131 = vector.broadcast %cst_47 : f32 to vector<1x32xf32>
    %132 = arith.addf %131, %130 : vector<1x32xf32>
    %cst_48 = arith.constant 1.000000e+00 : f32
    %133 = vector.broadcast %cst_48 : f32 to vector<1x32xf32>
    %134 = arith.divf %133, %132 : vector<1x32xf32>
    %135 = vector.extract_strided_slice %126 {offsets = [0, 32], sizes = [1, 32], strides = [1, 1]} : vector<1x128xf32> to vector<1x32xf32>
    %cst_49 = arith.constant 0.000000e+00 : f32
    %136 = vector.broadcast %cst_49 : f32 to vector<1x32xf32>
    %137 = arith.subf %136, %135 : vector<1x32xf32>
    %138 = math.exp %137 : vector<1x32xf32>
    %cst_50 = arith.constant 1.000000e+00 : f32
    %139 = vector.broadcast %cst_50 : f32 to vector<1x32xf32>
    %140 = arith.addf %139, %138 : vector<1x32xf32>
    %cst_51 = arith.constant 1.000000e+00 : f32
    %141 = vector.broadcast %cst_51 : f32 to vector<1x32xf32>
    %142 = arith.divf %141, %140 : vector<1x32xf32>
    %143 = vector.extract_strided_slice %126 {offsets = [0, 64], sizes = [1, 32], strides = [1, 1]} : vector<1x128xf32> to vector<1x32xf32>
    %144 = math.tanh %143 : vector<1x32xf32>
    %145 = vector.extract_strided_slice %126 {offsets = [0, 96], sizes = [1, 32], strides = [1, 1]} : vector<1x128xf32> to vector<1x32xf32>
    %cst_52 = arith.constant 0.000000e+00 : f32
    %146 = vector.broadcast %cst_52 : f32 to vector<1x32xf32>
    %147 = arith.subf %146, %145 : vector<1x32xf32>
    %148 = math.exp %147 : vector<1x32xf32>
    %cst_53 = arith.constant 1.000000e+00 : f32
    %149 = vector.broadcast %cst_53 : f32 to vector<1x32xf32>
    %150 = arith.addf %149, %148 : vector<1x32xf32>
    %cst_54 = arith.constant 1.000000e+00 : f32
    %151 = vector.broadcast %cst_54 : f32 to vector<1x32xf32>
    %152 = arith.divf %151, %150 : vector<1x32xf32>
    %153 = arith.mulf %142, %117 : vector<1x32xf32>
    %154 = arith.mulf %134, %144 : vector<1x32xf32>
    %155 = arith.addf %153, %154 : vector<1x32xf32>
    %156 = math.tanh %155 : vector<1x32xf32>
    %157 = arith.mulf %152, %156 : vector<1x32xf32>
    %158 = vector.shape_cast %157 : vector<1x32xf32> to vector<1x1x32xf32>
    %c0_55 = arith.constant 0 : index
    %c3 = arith.constant 3 : index
    %c0_56 = arith.constant 0 : index
    %159 = vector.load %arg9[%c0_55, %c3, %c0_56] : memref<1x8x32xf32, #tpu.memory_space<vmem>>, vector<1x1x32xf32>
    tpu.vector_store %arg9[%c0_55, %c3, %c0_56], %158 {strides = array<i32>} : memref<1x8x32xf32, #tpu.memory_space<vmem>>, vector<1x1x32xf32>,
    %160 = vector.extract_strided_slice %4 {offsets = [0, 4, 0], sizes = [1, 1, 128], strides = [1, 1, 1]} : vector<1x8x128xf32> to vector<1x1x128xf32>
    %161 = vector.shape_cast %160 : vector<1x1x128xf32> to vector<1x128xf32>
    %162 = arith.truncf %157 : vector<1x32xf32> to vector<1x32xbf16>
    %cst_57 = arith.constant dense<0.000000e+00> : vector<1x128xf32>
    %163 = tpu.matmul %162, %5, %cst_57 {dimension_numbers = #tpu.dot_dimension_numbers<[1], [0], [0], [1], [0, 0, 1, 1], [], []>} : vector<1x32xbf16>, vector<32x128xbf16>, vector<1x128xf32> -> vector<1x128xf32>
    %164 = arith.addf %161, %163 : vector<1x128xf32>
    %165 = vector.extract_strided_slice %164 {offsets = [0, 0], sizes = [1, 32], strides = [1, 1]} : vector<1x128xf32> to vector<1x32xf32>
    %cst_58 = arith.constant 0.000000e+00 : f32
    %166 = vector.broadcast %cst_58 : f32 to vector<1x32xf32>
    %167 = arith.subf %166, %165 : vector<1x32xf32>
    %168 = math.exp %167 : vector<1x32xf32>
    %cst_59 = arith.constant 1.000000e+00 : f32
    %169 = vector.broadcast %cst_59 : f32 to vector<1x32xf32>
    %170 = arith.addf %169, %168 : vector<1x32xf32>
    %cst_60 = arith.constant 1.000000e+00 : f32
    %171 = vector.broadcast %cst_60 : f32 to vector<1x32xf32>
    %172 = arith.divf %171, %170 : vector<1x32xf32>
    %173 = vector.extract_strided_slice %164 {offsets = [0, 32], sizes = [1, 32], strides = [1, 1]} : vector<1x128xf32> to vector<1x32xf32>
    %cst_61 = arith.constant 0.000000e+00 : f32
    %174 = vector.broadcast %cst_61 : f32 to vector<1x32xf32>
    %175 = arith.subf %174, %173 : vector<1x32xf32>
    %176 = math.exp %175 : vector<1x32xf32>
    %cst_62 = arith.constant 1.000000e+00 : f32
    %177 = vector.broadcast %cst_62 : f32 to vector<1x32xf32>
    %178 = arith.addf %177, %176 : vector<1x32xf32>
    %cst_63 = arith.constant 1.000000e+00 : f32
    %179 = vector.broadcast %cst_63 : f32 to vector<1x32xf32>
    %180 = arith.divf %179, %178 : vector<1x32xf32>
    %181 = vector.extract_strided_slice %164 {offsets = [0, 64], sizes = [1, 32], strides = [1, 1]} : vector<1x128xf32> to vector<1x32xf32>
    %182 = math.tanh %181 : vector<1x32xf32>
    %183 = vector.extract_strided_slice %164 {offsets = [0, 96], sizes = [1, 32], strides = [1, 1]} : vector<1x128xf32> to vector<1x32xf32>
    %cst_64 = arith.constant 0.000000e+00 : f32
    %184 = vector.broadcast %cst_64 : f32 to vector<1x32xf32>
    %185 = arith.subf %184, %183 : vector<1x32xf32>
    %186 = math.exp %185 : vector<1x32xf32>
    %cst_65 = arith.constant 1.000000e+00 : f32
    %187 = vector.broadcast %cst_65 : f32 to vector<1x32xf32>
    %188 = arith.addf %187, %186 : vector<1x32xf32>
    %cst_66 = arith.constant 1.000000e+00 : f32
    %189 = vector.broadcast %cst_66 : f32 to vector<1x32xf32>
    %190 = arith.divf %189, %188 : vector<1x32xf32>
    %191 = arith.mulf %180, %155 : vector<1x32xf32>
    %192 = arith.mulf %172, %182 : vector<1x32xf32>
    %193 = arith.addf %191, %192 : vector<1x32xf32>
    %194 = math.tanh %193 : vector<1x32xf32>
    %195 = arith.mulf %190, %194 : vector<1x32xf32>
    %196 = vector.shape_cast %195 : vector<1x32xf32> to vector<1x1x32xf32>
    %c0_67 = arith.constant 0 : index
    %c4 = arith.constant 4 : index
    %c0_68 = arith.constant 0 : index
    %197 = vector.load %arg9[%c0_67, %c4, %c0_68] : memref<1x8x32xf32, #tpu.memory_space<vmem>>, vector<1x1x32xf32>
    tpu.vector_store %arg9[%c0_67, %c4, %c0_68], %196 {strides = array<i32>} : memref<1x8x32xf32, #tpu.memory_space<vmem>>, vector<1x1x32xf32>,
    %198 = vector.extract_strided_slice %4 {offsets = [0, 5, 0], sizes = [1, 1, 128], strides = [1, 1, 1]} : vector<1x8x128xf32> to vector<1x1x128xf32>
    %199 = vector.shape_cast %198 : vector<1x1x128xf32> to vector<1x128xf32>
    %200 = arith.truncf %195 : vector<1x32xf32> to vector<1x32xbf16>
    %cst_69 = arith.constant dense<0.000000e+00> : vector<1x128xf32>
    %201 = tpu.matmul %200, %5, %cst_69 {dimension_numbers = #tpu.dot_dimension_numbers<[1], [0], [0], [1], [0, 0, 1, 1], [], []>} : vector<1x32xbf16>, vector<32x128xbf16>, vector<1x128xf32> -> vector<1x128xf32>
    %202 = arith.addf %199, %201 : vector<1x128xf32>
    %203 = vector.extract_strided_slice %202 {offsets = [0, 0], sizes = [1, 32], strides = [1, 1]} : vector<1x128xf32> to vector<1x32xf32>
    %cst_70 = arith.constant 0.000000e+00 : f32
    %204 = vector.broadcast %cst_70 : f32 to vector<1x32xf32>
    %205 = arith.subf %204, %203 : vector<1x32xf32>
    %206 = math.exp %205 : vector<1x32xf32>
    %cst_71 = arith.constant 1.000000e+00 : f32
    %207 = vector.broadcast %cst_71 : f32 to vector<1x32xf32>
    %208 = arith.addf %207, %206 : vector<1x32xf32>
    %cst_72 = arith.constant 1.000000e+00 : f32
    %209 = vector.broadcast %cst_72 : f32 to vector<1x32xf32>
    %210 = arith.divf %209, %208 : vector<1x32xf32>
    %211 = vector.extract_strided_slice %202 {offsets = [0, 32], sizes = [1, 32], strides = [1, 1]} : vector<1x128xf32> to vector<1x32xf32>
    %cst_73 = arith.constant 0.000000e+00 : f32
    %212 = vector.broadcast %cst_73 : f32 to vector<1x32xf32>
    %213 = arith.subf %212, %211 : vector<1x32xf32>
    %214 = math.exp %213 : vector<1x32xf32>
    %cst_74 = arith.constant 1.000000e+00 : f32
    %215 = vector.broadcast %cst_74 : f32 to vector<1x32xf32>
    %216 = arith.addf %215, %214 : vector<1x32xf32>
    %cst_75 = arith.constant 1.000000e+00 : f32
    %217 = vector.broadcast %cst_75 : f32 to vector<1x32xf32>
    %218 = arith.divf %217, %216 : vector<1x32xf32>
    %219 = vector.extract_strided_slice %202 {offsets = [0, 64], sizes = [1, 32], strides = [1, 1]} : vector<1x128xf32> to vector<1x32xf32>
    %220 = math.tanh %219 : vector<1x32xf32>
    %221 = vector.extract_strided_slice %202 {offsets = [0, 96], sizes = [1, 32], strides = [1, 1]} : vector<1x128xf32> to vector<1x32xf32>
    %cst_76 = arith.constant 0.000000e+00 : f32
    %222 = vector.broadcast %cst_76 : f32 to vector<1x32xf32>
    %223 = arith.subf %222, %221 : vector<1x32xf32>
    %224 = math.exp %223 : vector<1x32xf32>
    %cst_77 = arith.constant 1.000000e+00 : f32
    %225 = vector.broadcast %cst_77 : f32 to vector<1x32xf32>
    %226 = arith.addf %225, %224 : vector<1x32xf32>
    %cst_78 = arith.constant 1.000000e+00 : f32
    %227 = vector.broadcast %cst_78 : f32 to vector<1x32xf32>
    %228 = arith.divf %227, %226 : vector<1x32xf32>
    %229 = arith.mulf %218, %193 : vector<1x32xf32>
    %230 = arith.mulf %210, %220 : vector<1x32xf32>
    %231 = arith.addf %229, %230 : vector<1x32xf32>
    %232 = math.tanh %231 : vector<1x32xf32>
    %233 = arith.mulf %228, %232 : vector<1x32xf32>
    %234 = vector.shape_cast %233 : vector<1x32xf32> to vector<1x1x32xf32>
    %c0_79 = arith.constant 0 : index
    %c5 = arith.constant 5 : index
    %c0_80 = arith.constant 0 : index
    %235 = vector.load %arg9[%c0_79, %c5, %c0_80] : memref<1x8x32xf32, #tpu.memory_space<vmem>>, vector<1x1x32xf32>
    tpu.vector_store %arg9[%c0_79, %c5, %c0_80], %234 {strides = array<i32>} : memref<1x8x32xf32, #tpu.memory_space<vmem>>, vector<1x1x32xf32>,
    %236 = vector.extract_strided_slice %4 {offsets = [0, 6, 0], sizes = [1, 1, 128], strides = [1, 1, 1]} : vector<1x8x128xf32> to vector<1x1x128xf32>
    %237 = vector.shape_cast %236 : vector<1x1x128xf32> to vector<1x128xf32>
    %238 = arith.truncf %233 : vector<1x32xf32> to vector<1x32xbf16>
    %cst_81 = arith.constant dense<0.000000e+00> : vector<1x128xf32>
    %239 = tpu.matmul %238, %5, %cst_81 {dimension_numbers = #tpu.dot_dimension_numbers<[1], [0], [0], [1], [0, 0, 1, 1], [], []>} : vector<1x32xbf16>, vector<32x128xbf16>, vector<1x128xf32> -> vector<1x128xf32>
    %240 = arith.addf %237, %239 : vector<1x128xf32>
    %241 = vector.extract_strided_slice %240 {offsets = [0, 0], sizes = [1, 32], strides = [1, 1]} : vector<1x128xf32> to vector<1x32xf32>
    %cst_82 = arith.constant 0.000000e+00 : f32
    %242 = vector.broadcast %cst_82 : f32 to vector<1x32xf32>
    %243 = arith.subf %242, %241 : vector<1x32xf32>
    %244 = math.exp %243 : vector<1x32xf32>
    %cst_83 = arith.constant 1.000000e+00 : f32
    %245 = vector.broadcast %cst_83 : f32 to vector<1x32xf32>
    %246 = arith.addf %245, %244 : vector<1x32xf32>
    %cst_84 = arith.constant 1.000000e+00 : f32
    %247 = vector.broadcast %cst_84 : f32 to vector<1x32xf32>
    %248 = arith.divf %247, %246 : vector<1x32xf32>
    %249 = vector.extract_strided_slice %240 {offsets = [0, 32], sizes = [1, 32], strides = [1, 1]} : vector<1x128xf32> to vector<1x32xf32>
    %cst_85 = arith.constant 0.000000e+00 : f32
    %250 = vector.broadcast %cst_85 : f32 to vector<1x32xf32>
    %251 = arith.subf %250, %249 : vector<1x32xf32>
    %252 = math.exp %251 : vector<1x32xf32>
    %cst_86 = arith.constant 1.000000e+00 : f32
    %253 = vector.broadcast %cst_86 : f32 to vector<1x32xf32>
    %254 = arith.addf %253, %252 : vector<1x32xf32>
    %cst_87 = arith.constant 1.000000e+00 : f32
    %255 = vector.broadcast %cst_87 : f32 to vector<1x32xf32>
    %256 = arith.divf %255, %254 : vector<1x32xf32>
    %257 = vector.extract_strided_slice %240 {offsets = [0, 64], sizes = [1, 32], strides = [1, 1]} : vector<1x128xf32> to vector<1x32xf32>
    %258 = math.tanh %257 : vector<1x32xf32>
    %259 = vector.extract_strided_slice %240 {offsets = [0, 96], sizes = [1, 32], strides = [1, 1]} : vector<1x128xf32> to vector<1x32xf32>
    %cst_88 = arith.constant 0.000000e+00 : f32
    %260 = vector.broadcast %cst_88 : f32 to vector<1x32xf32>
    %261 = arith.subf %260, %259 : vector<1x32xf32>
    %262 = math.exp %261 : vector<1x32xf32>
    %cst_89 = arith.constant 1.000000e+00 : f32
    %263 = vector.broadcast %cst_89 : f32 to vector<1x32xf32>
    %264 = arith.addf %263, %262 : vector<1x32xf32>
    %cst_90 = arith.constant 1.000000e+00 : f32
    %265 = vector.broadcast %cst_90 : f32 to vector<1x32xf32>
    %266 = arith.divf %265, %264 : vector<1x32xf32>
    %267 = arith.mulf %256, %231 : vector<1x32xf32>
    %268 = arith.mulf %248, %258 : vector<1x32xf32>
    %269 = arith.addf %267, %268 : vector<1x32xf32>
    %270 = math.tanh %269 : vector<1x32xf32>
    %271 = arith.mulf %266, %270 : vector<1x32xf32>
    %272 = vector.shape_cast %271 : vector<1x32xf32> to vector<1x1x32xf32>
    %c0_91 = arith.constant 0 : index
    %c6 = arith.constant 6 : index
    %c0_92 = arith.constant 0 : index
    %273 = vector.load %arg9[%c0_91, %c6, %c0_92] : memref<1x8x32xf32, #tpu.memory_space<vmem>>, vector<1x1x32xf32>
    tpu.vector_store %arg9[%c0_91, %c6, %c0_92], %272 {strides = array<i32>} : memref<1x8x32xf32, #tpu.memory_space<vmem>>, vector<1x1x32xf32>,
    %274 = vector.extract_strided_slice %4 {offsets = [0, 7, 0], sizes = [1, 1, 128], strides = [1, 1, 1]} : vector<1x8x128xf32> to vector<1x1x128xf32>
    %275 = vector.shape_cast %274 : vector<1x1x128xf32> to vector<1x128xf32>
    %276 = arith.truncf %271 : vector<1x32xf32> to vector<1x32xbf16>
    %cst_93 = arith.constant dense<0.000000e+00> : vector<1x128xf32>
    %277 = tpu.matmul %276, %5, %cst_93 {dimension_numbers = #tpu.dot_dimension_numbers<[1], [0], [0], [1], [0, 0, 1, 1], [], []>} : vector<1x32xbf16>, vector<32x128xbf16>, vector<1x128xf32> -> vector<1x128xf32>
    %278 = arith.addf %275, %277 : vector<1x128xf32>
    %279 = vector.extract_strided_slice %278 {offsets = [0, 0], sizes = [1, 32], strides = [1, 1]} : vector<1x128xf32> to vector<1x32xf32>
    %cst_94 = arith.constant 0.000000e+00 : f32
    %280 = vector.broadcast %cst_94 : f32 to vector<1x32xf32>
    %281 = arith.subf %280, %279 : vector<1x32xf32>
    %282 = math.exp %281 : vector<1x32xf32>
    %cst_95 = arith.constant 1.000000e+00 : f32
    %283 = vector.broadcast %cst_95 : f32 to vector<1x32xf32>
    %284 = arith.addf %283, %282 : vector<1x32xf32>
    %cst_96 = arith.constant 1.000000e+00 : f32
    %285 = vector.broadcast %cst_96 : f32 to vector<1x32xf32>
    %286 = arith.divf %285, %284 : vector<1x32xf32>
    %287 = vector.extract_strided_slice %278 {offsets = [0, 32], sizes = [1, 32], strides = [1, 1]} : vector<1x128xf32> to vector<1x32xf32>
    %cst_97 = arith.constant 0.000000e+00 : f32
    %288 = vector.broadcast %cst_97 : f32 to vector<1x32xf32>
    %289 = arith.subf %288, %287 : vector<1x32xf32>
    %290 = math.exp %289 : vector<1x32xf32>
    %cst_98 = arith.constant 1.000000e+00 : f32
    %291 = vector.broadcast %cst_98 : f32 to vector<1x32xf32>
    %292 = arith.addf %291, %290 : vector<1x32xf32>
    %cst_99 = arith.constant 1.000000e+00 : f32
    %293 = vector.broadcast %cst_99 : f32 to vector<1x32xf32>
    %294 = arith.divf %293, %292 : vector<1x32xf32>
    %295 = vector.extract_strided_slice %278 {offsets = [0, 64], sizes = [1, 32], strides = [1, 1]} : vector<1x128xf32> to vector<1x32xf32>
    %296 = math.tanh %295 : vector<1x32xf32>
    %297 = vector.extract_strided_slice %278 {offsets = [0, 96], sizes = [1, 32], strides = [1, 1]} : vector<1x128xf32> to vector<1x32xf32>
    %cst_100 = arith.constant 0.000000e+00 : f32
    %298 = vector.broadcast %cst_100 : f32 to vector<1x32xf32>
    %299 = arith.subf %298, %297 : vector<1x32xf32>
    %300 = math.exp %299 : vector<1x32xf32>
    %cst_101 = arith.constant 1.000000e+00 : f32
    %301 = vector.broadcast %cst_101 : f32 to vector<1x32xf32>
    %302 = arith.addf %301, %300 : vector<1x32xf32>
    %cst_102 = arith.constant 1.000000e+00 : f32
    %303 = vector.broadcast %cst_102 : f32 to vector<1x32xf32>
    %304 = arith.divf %303, %302 : vector<1x32xf32>
    %305 = arith.mulf %294, %269 : vector<1x32xf32>
    %306 = arith.mulf %286, %296 : vector<1x32xf32>
    %307 = arith.addf %305, %306 : vector<1x32xf32>
    %308 = math.tanh %307 : vector<1x32xf32>
    %309 = arith.mulf %304, %308 : vector<1x32xf32>
    %310 = vector.shape_cast %309 : vector<1x32xf32> to vector<1x1x32xf32>
    %c0_103 = arith.constant 0 : index
    %c7 = arith.constant 7 : index
    %c0_104 = arith.constant 0 : index
    %311 = vector.load %arg9[%c0_103, %c7, %c0_104] : memref<1x8x32xf32, #tpu.memory_space<vmem>>, vector<1x1x32xf32>
    tpu.vector_store %arg9[%c0_103, %c7, %c0_104], %310 {strides = array<i32>} : memref<1x8x32xf32, #tpu.memory_space<vmem>>, vector<1x1x32xf32>,
    %c0_105 = arith.constant 0 : index
    %c0_106 = arith.constant 0 : index
    %c0_107 = arith.constant 0 : index
    %312 = vector.load %arg9[%c0_105, %c0_106, %c0_107] : memref<1x8x32xf32, #tpu.memory_space<vmem>>, vector<1x8x32xf32>
    %313 = vector.shape_cast %312 : vector<1x8x32xf32> to vector<8x32xf32>
    %314 = arith.truncf %313 : vector<8x32xf32> to vector<8x32xbf16>
    %c0_108 = arith.constant 0 : index
    %c0_109 = arith.constant 0 : index
    %315 = vector.load %arg4[%c0_108, %c0_109] : memref<32x128xbf16, #tpu.memory_space<vmem>>, vector<32x128xbf16>
    %cst_110 = arith.constant dense<0.000000e+00> : vector<8x128xf32>
    %316 = tpu.matmul %314, %315, %cst_110 {dimension_numbers = #tpu.dot_dimension_numbers<[1], [0], [0], [1], [0, 0, 1, 1], [], []>} : vector<8x32xbf16>, vector<32x128xbf16>, vector<8x128xf32> -> vector<8x128xf32>
    %c0_111 = arith.constant 0 : index
    %c0_112 = arith.constant 0 : index
    %317 = vector.load %arg5[%c0_111, %c0_112] : memref<1x128xf32, #tpu.memory_space<vmem>>, vector<1x128xf32>
    %318 = vector.broadcast %317 : vector<1x128xf32> to vector<8x128xf32>
    %319 = arith.addf %316, %318 : vector<8x128xf32>
    %320 = arith.truncf %319 : vector<8x128xf32> to vector<8x128xbf16>
    %c0_113 = arith.constant 0 : index
    %c0_114 = arith.constant 0 : index
    %321 = vector.load %arg6[%c0_113, %c0_114] : memref<128x128xbf16, #tpu.memory_space<vmem>>, vector<128x128xbf16>
    %cst_115 = arith.constant dense<0.000000e+00> : vector<8x128xf32>
    %322 = tpu.matmul %320, %321, %cst_115 {dimension_numbers = #tpu.dot_dimension_numbers<[1], [0], [0], [1], [0, 0, 1, 1], [], []>} : vector<8x128xbf16>, vector<128x128xbf16>, vector<8x128xf32> -> vector<8x128xf32>
    %c0_116 = arith.constant 0 : index
    %c0_117 = arith.constant 0 : index
    %323 = vector.load %arg7[%c0_116, %c0_117] : memref<1x128xf32, #tpu.memory_space<vmem>>, vector<1x128xf32>
    %324 = vector.broadcast %323 : vector<1x128xf32> to vector<8x128xf32>
    %325 = arith.addf %322, %324 : vector<8x128xf32>
    %326 = vector.shape_cast %325 : vector<8x128xf32> to vector<1x8x128xf32>
    %c0_118 = arith.constant 0 : index
    %c0_119 = arith.constant 0 : index
    %c0_120 = arith.constant 0 : index
    %327 = vector.load %arg8[%c0_118, %c0_119, %c0_120] : memref<1x8x128xf32, #tpu.memory_space<vmem>>, vector<1x8x128xf32>
    tpu.vector_store %arg8[%c0_118, %c0_119, %c0_120], %326 {strides = array<i32>} : memref<1x8x128xf32, #tpu.memory_space<vmem>>, vector<1x8x128xf32>,
    return
  }
  func.func @transform_0(%arg0: i32) -> (i32, i32, i32) {
    %c0_i32 = arith.constant 0 : i32
    %c0_i32_0 = arith.constant 0 : i32
    %c0_i32_1 = arith.constant 0 : i32
    return %arg0, %c0_i32, %c0_i32_0 : i32, i32, i32
  }
  func.func @transform_1(%arg0: i32) -> (i32, i32) {
    %c0_i32 = arith.constant 0 : i32
    %c0_i32_0 = arith.constant 0 : i32
    %c0_i32_1 = arith.constant 0 : i32
    return %c0_i32, %c0_i32_0 : i32, i32
  }
  func.func @transform_2(%arg0: i32) -> (i32, i32) {
    %c0_i32 = arith.constant 0 : i32
    %c0_i32_0 = arith.constant 0 : i32
    %c0_i32_1 = arith.constant 0 : i32
    return %c0_i32, %c0_i32_0 : i32, i32
  }
  func.func @transform_3(%arg0: i32) -> (i32, i32) {
    %c0_i32 = arith.constant 0 : i32
    %c0_i32_0 = arith.constant 0 : i32
    %c0_i32_1 = arith.constant 0 : i32
    return %c0_i32, %c0_i32_0 : i32, i32
  }
  func.func @transform_4(%arg0: i32) -> (i32, i32) {
    %c0_i32 = arith.constant 0 : i32
    %c0_i32_0 = arith.constant 0 : i32
    %c0_i32_1 = arith.constant 0 : i32
    return %c0_i32, %c0_i32_0 : i32, i32
  }
  func.func @transform_5(%arg0: i32) -> (i32, i32) {
    %c0_i32 = arith.constant 0 : i32
    %c0_i32_0 = arith.constant 0 : i32
    %c0_i32_1 = arith.constant 0 : i32
    return %c0_i32, %c0_i32_0 : i32, i32
  }
  func.func @transform_6(%arg0: i32) -> (i32, i32) {
    %c0_i32 = arith.constant 0 : i32
    %c0_i32_0 = arith.constant 0 : i32
    %c0_i32_1 = arith.constant 0 : i32
    return %c0_i32, %c0_i32_0 : i32, i32
  }
  func.func @transform_7(%arg0: i32) -> (i32, i32, i32) {
    %c0_i32 = arith.constant 0 : i32
    %c0_i32_0 = arith.constant 0 : i32
    %c0_i32_1 = arith.constant 0 : i32
    return %arg0, %c0_i32, %c0_i32_0 : i32, i32, i32
  }
}

</mosaic_0001>

<llo_original>
// kernel: tpu_custom_call.1
$region0: #{tpu_custom_call.1}
  #allocation0 [shape = 'u32[]', space=smem, size = 0x4, offset = 0x4, fixed_abs, tag = 'smem constant byte address 0x4 - core index']
  #allocation1 [shape = 'u32[72,128]{1,0:T(1,128)}', space=vmem, size = 0x9000, scoped, tag = 'internal scratch']
  #allocation2 [shape = 'f32[1,8,32]{2,1,0:T(8,128)}', space=vmem, size = 0x1000, scoped, tag = 'scratch operand']
  %s0 = inlined_call_operand.hbm [shape: bf16[2,8,32], index: 0, kind: input, shape index: {}]
  %s1 = inlined_call_operand.hbm [shape: bf16[32,128], index: 1, kind: input, shape index: {}]
  %s2 = inlined_call_operand.hbm [shape: bf16[32,128], index: 2, kind: input, shape index: {}]
  %s3 = inlined_call_operand.hbm [shape: bf16[32,128], index: 3, kind: input, shape index: {}]
  %s4 = inlined_call_operand.vmem [shape: f32[1,128], index: 4, kind: input, shape index: {}]
  %s5 = inlined_call_operand.hbm [shape: bf16[128,128], index: 5, kind: input, shape index: {}]
  %s6 = inlined_call_operand.vmem [shape: f32[1,128], index: 6, kind: input, shape index: {}]
  %s7 = inlined_call_operand.hbm [shape: f32[2,8,128], index: 7, kind: output, shape index: {}]
  %s8 = sld [smem:[#allocation0]]
  $region81: #{tpu_custom_call.1} parent=0
    _
  %s10 = ssub.s32 1, %s8
  %s11 = scalar_select 0, %s10, %s8
  $region1: #{tpu_custom_call.1} parent=0
    #allocation3 [shape = 'u8[4096]{0}', space=vmem, size = 0x1000, scoped, tag = 'input window, operand 0']
    #allocation4 [shape = 's32[2]{0}', space=sflag, size = 0x8, scoped, tag = 'scoped memory for tpu_custom_call.1']
    #allocation5 [shape = 's32[2]{0}', space=sflag, size = 0x8, scoped, tag = 'scoped memory for tpu_custom_call.1']
    #allocation6 [shape = 'u8[8192]{0}', space=vmem, size = 0x2000, scoped, tag = 'input window, operand 1, single buffered']
    #allocation7 [shape = 's32[1]{0}', space=sflag, size = 0x4, scoped, tag = 'scoped memory for tpu_custom_call.1']
    #allocation8 [shape = 'u8[8192]{0}', space=vmem, size = 0x2000, scoped, tag = 'input window, operand 2, single buffered']
    #allocation9 [shape = 'u8[8192]{0}', space=vmem, size = 0x2000, scoped, tag = 'input window, operand 3, single buffered']
    #allocation10 [shape = 's32[1]{0}', space=sflag, size = 0x4, scoped, tag = 'scoped memory for tpu_custom_call.1']
    #allocation11 [shape = 'u8[32768]{0}', space=vmem, size = 0x8000, scoped, tag = 'input window, operand 5, single buffered']
    #allocation12 [shape = 'u8[8192]{0}', space=vmem, size = 0x2000, scoped, tag = 'output window, operand 0']
    %12 = vsyncpa [#allocation4], 0
    %s13 = scalar_lea.sflag [#allocation4], 1
    %14 = vsyncpa %s13, 0
    %15 = vsyncpa [#allocation7], 0
    %16 = vsyncpa [#allocation10], 0
    %17 = vsyncpa [#allocation5], 0
    %s18 = scalar_lea.sflag [#allocation5], 1
    %19 = vsyncpa %s18, 0
    loop: start=0, step=1, limit=4
    $region2: #{tpu_custom_call.1} parent=1 // loop_pre_header
      _
    $region3: #{tpu_custom_call.1} parent=1 // loop_header
      %s21 = sphi 0, %s25
      %p22 = scmp.ge.s32.totalorder %s21, 4
      %s31 = sphi 0, %s33
      %s34 = sphi 0, %s31
      %s35 = sphi 0, %s34
      %s51 = sphi 0, %s35
      %s55 = sphi 0, %s55
      %s57 = sphi 0, %s55
      %s58 = sphi 0, %s57
      %s72 = sphi 0, %s58
      %s76 = sphi 0, %s76
      %s78 = sphi 0, %s76
      %s79 = sphi 0, %s78
      %s93 = sphi 0, %s79
      %s97 = sphi 0, %s97
      %s99 = sphi 0, %s97
      %s100 = sphi 0, %s99
      %s114 = sphi 0, %s100
      %s118 = sphi 0, %s118
      %s120 = sphi 0, %s118
      %s121 = sphi 0, %s120
      %s135 = sphi 0, %s121
      %s139 = sphi 0, %s139
      %s141 = sphi 0, %s139
      %s142 = sphi 0, %s141
      %s156 = sphi 0, %s142
      %s160 = sphi 0, %s160
      %s162 = sphi 0, %s160
      %s163 = sphi 0, %s162
      %s177 = sphi 0, %s163
      %s183 = sphi 0, %s185
      %s186 = sphi 0, %s183
      %s187 = sphi 0, %s186
      %s203 = sphi 0, %s187
    $region4: #{tpu_custom_call.1} parent=1 // loop_header_branch
      %24 = sbr.rel (%p22) target = $region8
    $region5: #{tpu_custom_call.1} parent=1 // loop_body
      %s26 = ssub.s32 %s21, 1
      %s27 = ssub.s32 %s21, 2
      %s28 = sadd.s32 %s21, 1
      %s29 = ssub.s32 %s21, %s28
      %p30 = scmp.eq.s32.totalorder %s29, 0
      %s32 = sadd.s32 %s31, 1
      %s33 = scalar_select %p30, %s31, %s32
      %p36 = pneg %p30
      %p37 = scmp.eq.s32.totalorder %s21, 1
      %p38 = por %p36, %p37
      %p39 = scmp.ne.s32.totalorder %s31, %s34
      %p40 = scmp.eq.s32.totalorder %s21, 0
      %p41 = por %p39, %p40
      %p42 = scmp.ne.s32.totalorder %s31, %s34
      %p43 = scmp.eq.s32.totalorder %s26, 1
      %p44 = por %p42, %p43
      %p45 = scmp.ne.s32.totalorder %s34, %s35
      %p46 = scmp.eq.s32.totalorder %s26, 0
      %p47 = por %p45, %p46
      %p48 = scmp.ne.s32.totalorder %s34, %s35
      %p49 = scmp.eq.s32.totalorder %s27, 1
      %p50 = por %p48, %p49
      %p52 = scmp.ne.s32.totalorder %s35, %s51
      %p53 = scmp.eq.s32.totalorder %s27, 0
      %p54 = por %p52, %p53
      %s56 = sadd.s32 %s55, 1
      %p59 = scmp.eq.s32.totalorder %s21, 1
      %p60 = scmp.ne.s32.totalorder %s55, %s57
      %p61 = scmp.eq.s32.totalorder %s21, 0
      %p62 = por %p60, %p61
      %p63 = scmp.ne.s32.totalorder %s55, %s57
      %p64 = scmp.eq.s32.totalorder %s26, 1
      %p65 = por %p63, %p64
      %p66 = scmp.ne.s32.totalorder %s57, %s58
      %p67 = scmp.eq.s32.totalorder %s26, 0
      %p68 = por %p66, %p67
      %p69 = scmp.ne.s32.totalorder %s57, %s58
      %p70 = scmp.eq.s32.totalorder %s27, 1
      %p71 = por %p69, %p70
      %p73 = scmp.ne.s32.totalorder %s58, %s72
      %p74 = scmp.eq.s32.totalorder %s27, 0
      %p75 = por %p73, %p74
      %s77 = sadd.s32 %s76, 1
      %p80 = scmp.eq.s32.totalorder %s21, 1
      %p81 = scmp.ne.s32.totalorder %s76, %s78
      %p82 = scmp.eq.s32.totalorder %s21, 0
      %p83 = por %p81, %p82
      %p84 = scmp.ne.s32.totalorder %s76, %s78
      %p85 = scmp.eq.s32.totalorder %s26, 1
      %p86 = por %p84, %p85
      %p87 = scmp.ne.s32.totalorder %s78, %s79
      %p88 = scmp.eq.s32.totalorder %s26, 0
      %p89 = por %p87, %p88
      %p90 = scmp.ne.s32.totalorder %s78, %s79
      %p91 = scmp.eq.s32.totalorder %s27, 1
      %p92 = por %p90, %p91
      %p94 = scmp.ne.s32.totalorder %s79, %s93
      %p95 = scmp.eq.s32.totalorder %s27, 0
      %p96 = por %p94, %p95
      %s98 = sadd.s32 %s97, 1
      %p101 = scmp.eq.s32.totalorder %s21, 1
      %p102 = scmp.ne.s32.totalorder %s97, %s99
      %p103 = scmp.eq.s32.totalorder %s21, 0
      %p104 = por %p102, %p103
      %p105 = scmp.ne.s32.totalorder %s97, %s99
      %p106 = scmp.eq.s32.totalorder %s26, 1
      %p107 = por %p105, %p106
      %p108 = scmp.ne.s32.totalorder %s99, %s100
      %p109 = scmp.eq.s32.totalorder %s26, 0
      %p110 = por %p108, %p109
      %p111 = scmp.ne.s32.totalorder %s99, %s100
      %p112 = scmp.eq.s32.totalorder %s27, 1
      %p113 = por %p111, %p112
      %p115 = scmp.ne.s32.totalorder %s100, %s114
      %p116 = scmp.eq.s32.totalorder %s27, 0
      %p117 = por %p115, %p116
      %s119 = sadd.s32 %s118, 1
      %p122 = scmp.eq.s32.totalorder %s21, 1
      %p123 = scmp.ne.s32.totalorder %s118, %s120
      %p124 = scmp.eq.s32.totalorder %s21, 0
      %p125 = por %p123, %p124
      %p126 = scmp.ne.s32.totalorder %s118, %s120
      %p127 = scmp.eq.s32.totalorder %s26, 1
      %p128 = por %p126, %p127
      %p129 = scmp.ne.s32.totalorder %s120, %s121
      %p130 = scmp.eq.s32.totalorder %s26, 0
      %p131 = por %p129, %p130
      %p132 = scmp.ne.s32.totalorder %s120, %s121
      %p133 = scmp.eq.s32.totalorder %s27, 1
      %p134 = por %p132, %p133
      %p136 = scmp.ne.s32.totalorder %s121, %s135
      %p137 = scmp.eq.s32.totalorder %s27, 0
      %p138 = por %p136, %p137
      %s140 = sadd.s32 %s139, 1
      %p143 = scmp.eq.s32.totalorder %s21, 1
      %p144 = scmp.ne.s32.totalorder %s139, %s141
      %p145 = scmp.eq.s32.totalorder %s21, 0
      %p146 = por %p144, %p145
      %p147 = scmp.ne.s32.totalorder %s139, %s141
      %p148 = scmp.eq.s32.totalorder %s26, 1
      %p149 = por %p147, %p148
      %p150 = scmp.ne.s32.totalorder %s141, %s142
      %p151 = scmp.eq.s32.totalorder %s26, 0
      %p152 = por %p150, %p151
      %p153 = scmp.ne.s32.totalorder %s141, %s142
      %p154 = scmp.eq.s32.totalorder %s27, 1
      %p155 = por %p153, %p154
      %p157 = scmp.ne.s32.totalorder %s142, %s156
      %p158 = scmp.eq.s32.totalorder %s27, 0
      %p159 = por %p157, %p158
      %s161 = sadd.s32 %s160, 1
      %p164 = scmp.eq.s32.totalorder %s21, 1
      %p165 = scmp.ne.s32.totalorder %s160, %s162
      %p166 = scmp.eq.s32.totalorder %s21, 0
      %p167 = por %p165, %p166
      %p168 = scmp.ne.s32.totalorder %s160, %s162
      %p169 = scmp.eq.s32.totalorder %s26, 1
      %p170 = por %p168, %p169
      %p171 = scmp.ne.s32.totalorder %s162, %s163
      %p172 = scmp.eq.s32.totalorder %s26, 0
      %p173 = por %p171, %p172
      %p174 = scmp.ne.s32.totalorder %s162, %s163
      %p175 = scmp.eq.s32.totalorder %s27, 1
      %p176 = por %p174, %p175
      %p178 = scmp.ne.s32.totalorder %s163, %s177
      %p179 = scmp.eq.s32.totalorder %s27, 0
      %p180 = por %p178, %p179
      %s181 = ssub.s32 %s21, %s28
      %p182 = scmp.eq.s32.totalorder %s181, 0
      %s184 = sadd.s32 %s183, 1
      %s185 = scalar_select %p182, %s183, %s184
      %p188 = pneg %p182
      %p189 = scmp.eq.s32.totalorder %s21, 1
      %p190 = por %p188, %p189
      %p191 = scmp.ne.s32.totalorder %s183, %s186
      %p192 = scmp.eq.s32.totalorder %s21, 0
      %p193 = por %p191, %p192
      %p194 = scmp.ne.s32.totalorder %s183, %s186
      %p195 = scmp.eq.s32.totalorder %s26, 1
      %p196 = por %p194, %p195
      %p197 = scmp.ne.s32.totalorder %s186, %s187
      %p198 = scmp.eq.s32.totalorder %s26, 0
      %p199 = por %p197, %p198
      %p200 = scmp.ne.s32.totalorder %s186, %s187
      %p201 = scmp.eq.s32.totalorder %s27, 1
      %p202 = por %p200, %p201
      %p204 = scmp.ne.s32.totalorder %s187, %s203
      %p205 = scmp.eq.s32.totalorder %s27, 0
      %p206 = por %p204, %p205
      %p207 = scmp.le.s32.totalorder 1, %s21
      %p208 = scmp.lt.s32.totalorder %s21, 3
      %p209 = pnand %p207, %p208
      %p210 = pneg %p209
      // Predicated region
      $region9: #{tpu_custom_call.1} parent=5 // pred_check
        _
      $region10: #{tpu_custom_call.1} parent=5 // pred_check_branch
        %212 = sbr.rel (%p209) target = $region12
      $region11: #{tpu_custom_call.1} parent=5 // pred_region
        %s213 = ssub.s32 %s21, 1
        // Predicated region
        $region13: #{tpu_custom_call.1} parent=11 // pred_check
          %p214 = pneg %p68
        $region14: #{tpu_custom_call.1} parent=11 // pred_check_branch
          %216 = sbr.rel (%p214) target = $region16
        $region15: #{tpu_custom_call.1} parent=11 // pred_region
          %218 = vsyncadd [#allocation7], 0
          %s219 = sshll.u32 %s1, 4
          %s220 = int_to_ptr.hbm [resolvable:$true] %s219
          %s221 = sshll.u32 [#allocation6], 4
          %s222 = int_to_ptr.vmem [resolvable:$true] %s221
          %227 = dma.hbm_to_vmem [thread:$0]  %s220, 256, %s222, [#allocation7], 64, 64, 4
        $region16: #{tpu_custom_call.1} parent=11 // pred_fallthru
          _
        // Predicated region
        $region17: #{tpu_custom_call.1} parent=11 // pred_check
          %p228 = pneg %p89
        $region18: #{tpu_custom_call.1} parent=11 // pred_check_branch
          %230 = sbr.rel (%p228) target = $region20
        $region19: #{tpu_custom_call.1} parent=11 // pred_region
          %232 = vsyncadd [#allocation7], 0
          %s233 = sshll.u32 %s2, 4
          %s234 = int_to_ptr.hbm [resolvable:$true] %s233
          %s235 = sshll.u32 [#allocation8], 4
          %s236 = int_to_ptr.vmem [resolvable:$true] %s235
          %241 = dma.hbm_to_vmem [thread:$0]  %s234, 256, %s236, [#allocation7], 64, 64, 4
        $region20: #{tpu_custom_call.1} parent=11 // pred_fallthru
          _
        // Predicated region
        $region21: #{tpu_custom_call.1} parent=11 // pred_check
          %p242 = pneg %p110
        $region22: #{tpu_custom_call.1} parent=11 // pred_check_branch
          %244 = sbr.rel (%p242) target = $region24
        $region23: #{tpu_custom_call.1} parent=11 // pred_region
          %246 = vsyncadd [#allocation10], 0
          %s247 = sshll.u32 %s3, 4
          %s248 = int_to_ptr.hbm [resolvable:$true] %s247
          %s249 = sshll.u32 [#allocation9], 4
          %s250 = int_to_ptr.vmem [resolvable:$true] %s249
          %255 = dma.hbm_to_vmem [thread:$0]  %s248, 256, %s250, [#allocation10], 64, 64, 4
        $region24: #{tpu_custom_call.1} parent=11 // pred_fallthru
          _
        // Predicated region
        $region25: #{tpu_custom_call.1} parent=11 // pred_check
          %p256 = pneg %p131
        $region26: #{tpu_custom_call.1} parent=11 // pred_check_branch
          %258 = sbr.rel (%p256) target = $region28
        $region27: #{tpu_custom_call.1} parent=11 // pred_region
          _
        $region28: #{tpu_custom_call.1} parent=11 // pred_fallthru
          _
        // Predicated region
        $region29: #{tpu_custom_call.1} parent=11 // pred_check
          %p259 = pneg %p152
        $region30: #{tpu_custom_call.1} parent=11 // pred_check_branch
          %261 = sbr.rel (%p259) target = $region32
        $region31: #{tpu_custom_call.1} parent=11 // pred_region
          %263 = vsyncadd [#allocation10], 0
          %s264 = sshll.u32 %s5, 4
          %s265 = int_to_ptr.hbm [resolvable:$true] %s264
          %s266 = sshll.u32 [#allocation11], 4
          %s267 = int_to_ptr.vmem [resolvable:$true] %s266
          %272 = dma.hbm_to_vmem [thread:$0]  %s265, 1024, %s267, [#allocation10], 64, 64, 4
        $region32: #{tpu_custom_call.1} parent=11 // pred_fallthru
          _
        // Predicated region
        $region33: #{tpu_custom_call.1} parent=11 // pred_check
          %p273 = pneg %p173
        $region34: #{tpu_custom_call.1} parent=11 // pred_check_branch
          %275 = sbr.rel (%p273) target = $region36
        $region35: #{tpu_custom_call.1} parent=11 // pred_region
          _
        $region36: #{tpu_custom_call.1} parent=11 // pred_fallthru
          _
      $region12: #{tpu_custom_call.1} parent=5 // pred_fallthru
        _
      %p276 = scmp.lt.s32.totalorder %s21, 2
      // Predicated region
      $region37: #{tpu_custom_call.1} parent=5 // pred_check
        %p277 = pneg %p276
      $region38: #{tpu_custom_call.1} parent=5 // pred_check_branch
        %279 = sbr.rel (%p277) target = $region40
      $region39: #{tpu_custom_call.1} parent=5 // pred_region
        // Predicated region
        $region41: #{tpu_custom_call.1} parent=39 // pred_check
          %p280 = pneg %p41
        $region42: #{tpu_custom_call.1} parent=39 // pred_check_branch
          %282 = sbr.rel (%p280) target = $region44
        $region43: #{tpu_custom_call.1} parent=39 // pred_region
          %s283 = sand.u32 %s31, 1
          %s284 = scalar_lea.sflag [#allocation4], %s283
          %s285 = sand.u32 %s31, 1
          %s286 = smul.addr %s285, 4
          %s287 = scalar_lea.vmem [#allocation3], %s286
          %289 = vsyncadd %s284, 0
          %s290 = smul.addr %s21, 4
          %s291 = scalar_lea.hbm %s0, %s290
          %s293 = sshll.u32 %s291, 4
          %s294 = int_to_ptr.hbm [resolvable:$true] %s293
          %s295 = sshll.u32 %s287, 4
          %s296 = int_to_ptr.vmem [resolvable:$true] %s295
          %298 = dma.hbm_to_vmem [thread:$0]  %s294, 64, %s296, %s284
        $region44: #{tpu_custom_call.1} parent=39 // pred_fallthru
          _
      $region40: #{tpu_custom_call.1} parent=5 // pred_fallthru
        _
      %p299 = scmp.le.s32.totalorder 1, %s21
      %p300 = scmp.lt.s32.totalorder %s21, 3
      %p301 = pnand %p299, %p300
      %p302 = pneg %p301
      // Predicated region
      $region45: #{tpu_custom_call.1} parent=5 // pred_check
        _
      $region46: #{tpu_custom_call.1} parent=5 // pred_check_branch
        %304 = sbr.rel (%p301) target = $region48
      $region47: #{tpu_custom_call.1} parent=5 // pred_region
        %s305 = ssub.s32 %s21, 1
        %s306 = sand.u32 %s34, 1
        %s307 = scalar_lea.sflag [#allocation4], %s306
        %s308 = sand.u32 %s34, 1
        %s309 = smul.addr %s308, 4
        %s310 = scalar_lea.vmem [#allocation3], %s309
        // Predicated region
        $region49: #{tpu_custom_call.1} parent=47 // pred_check
          %p311 = pneg %p47
        $region50: #{tpu_custom_call.1} parent=47 // pred_check_branch
          %313 = sbr.rel (%p311) target = $region52
        $region51: #{tpu_custom_call.1} parent=47 // pred_region
          %315 = dma.done %s307, 64
        $region52: #{tpu_custom_call.1} parent=47 // pred_fallthru
          _
        // Predicated region
        $region53: #{tpu_custom_call.1} parent=47 // pred_check
          %p316 = pneg %p68
        $region54: #{tpu_custom_call.1} parent=47 // pred_check_branch
          %318 = sbr.rel (%p316) target = $region56
        $region55: #{tpu_custom_call.1} parent=47 // pred_region
          %320 = dma.done [#allocation7], 256
        $region56: #{tpu_custom_call.1} parent=47 // pred_fallthru
          _
        // Predicated region
        $region57: #{tpu_custom_call.1} parent=47 // pred_check
          %p321 = pneg %p89
        $region58: #{tpu_custom_call.1} parent=47 // pred_check_branch
          %323 = sbr.rel (%p321) target = $region60
        $region59: #{tpu_custom_call.1} parent=47 // pred_region
          %325 = dma.done [#allocation7], 256
        $region60: #{tpu_custom_call.1} parent=47 // pred_fallthru
          _
        // Predicated region
        $region61: #{tpu_custom_call.1} parent=47 // pred_check
          %p326 = pneg %p110
        $region62: #{tpu_custom_call.1} parent=47 // pred_check_branch
          %328 = sbr.rel (%p326) target = $region64
        $region63: #{tpu_custom_call.1} parent=47 // pred_region
          %330 = dma.done [#allocation10], 256
        $region64: #{tpu_custom_call.1} parent=47 // pred_fallthru
          _
        // Predicated region
        $region65: #{tpu_custom_call.1} parent=47 // pred_check
          %p331 = pneg %p152
        $region66: #{tpu_custom_call.1} parent=47 // pred_check_branch
          %333 = sbr.rel (%p331) target = $region68
        $region67: #{tpu_custom_call.1} parent=47 // pred_region
          %335 = dma.done [#allocation10], 1024
        $region68: #{tpu_custom_call.1} parent=47 // pred_fallthru
          _
        %s336 = sand.u32 %s34, 1
        %s337 = scalar_lea.sflag [#allocation4], %s336
        %s338 = sand.u32 %s34, 1
        %s339 = smul.addr %s338, 4
        %s340 = scalar_lea.vmem [#allocation3], %s339
        %p341 = pneg %p47
        %p342 = pneg %p44
        %p343 = pneg %p68
        %p344 = pneg %p65
        %p345 = pneg %p89
        %p346 = pneg %p86
        %p347 = pneg %p110
        %p348 = pneg %p107
        %p349 = pneg %p131
        %p350 = pneg %p128
        %p351 = pneg %p152
        %p352 = pneg %p149
        %p353 = pneg %p173
        %p354 = pneg %p170
        %p355 = pneg %p199
        %p356 = pneg %p196
        %s357 = sand.u32 %s186, 1
        %s358 = scalar_lea.sflag [#allocation5], %s357
        %s359 = sand.u32 %s186, 1
        %s360 = smul.addr %s359, 8
        %s361 = scalar_lea.vmem [#allocation12], %s360
        %v363 = vld [vmem:[%s310] sm:$0xf]
        %v364 = vld [vmem:[#allocation6] sm:$0xf]
        %v365 = vld [vmem:[#allocation6 + $0x4] sm:$0xf]
        %v366 = vld [vmem:[#allocation6 + $0x8] sm:$0xf]
        %v367 = vld [vmem:[#allocation6 + $0xc] sm:$0xf]
        %v372 = vunpack.c.l.b16 %v364
        %v373 = vunpack.c.l.b16 %v365
        %v374 = vunpack.c.l.b16 %v366
        %v375 = vunpack.c.l.b16 %v367
        %v376 = vpack.c.b16 %v373, %v372
        %v377 = vpack.c.b16 %v375, %v374
        %vm380 = vcmask 261120
        %v382 = vsel %vm380, %v363, 0
        %384 = vmatpush.bf16.msra.mxu0 0
        %385 = vmatpush.bf16.msra.mxu0 0
        %386 = vmatpush.bf16.msra.mxu0 0
        %387 = vmatpush.bf16.msra.mxu0 0
        %388 = vmatpush.bf16.msra.mxu0 0
        %389 = vmatpush.bf16.msra.mxu0 0
        %390 = vmatpush.bf16.msra.mxu0 %v377
        %391 = vmatpush.bf16.msra.mxu0 %v376
        %392 = vmatmul.bf16.gmra.mxu0 %v382
        %v393 = vpop.f32.mrf.mxu0
        %v394 = vadd.f32 0.0, %v393
        %v395 = vpop.f32.mrf.mxu0
        %396 = vdwg.mxu0
        %v397 = vld [vmem:[#allocation8] sm:$0xf]
        %v398 = vld [vmem:[#allocation8 + $0x4] sm:$0xf]
        %v399 = vld [vmem:[#allocation8 + $0x8] sm:$0xf]
        %v400 = vld [vmem:[#allocation8 + $0xc] sm:$0xf]
        %v405 = vunpack.c.l.b16 %v397
        %v406 = vunpack.c.l.b16 %v398
        %v407 = vunpack.c.l.b16 %v399
        %v408 = vunpack.c.l.b16 %v400
        %v409 = vpack.c.b16 %v406, %v405
        %v410 = vpack.c.b16 %v408, %v407
        %v414 = vsel %vm380, 0, 0
        %416 = vmatpush.bf16.msra.mxu0 0
        %417 = vmatpush.bf16.msra.mxu0 0
        %418 = vmatpush.bf16.msra.mxu0 0
        %419 = vmatpush.bf16.msra.mxu0 0
        %420 = vmatpush.bf16.msra.mxu0 0
        %421 = vmatpush.bf16.msra.mxu0 0
        %422 = vmatpush.bf16.msra.mxu0 %v410
        %423 = vmatpush.bf16.msra.mxu0 %v409
        %424 = vmatmul.bf16.gmra.mxu0 %v414
        %v425 = vpop.f32.mrf.mxu0
        %v426 = vadd.f32 0.0, %v425
        %v427 = vpop.f32.mrf.mxu0
        %428 = vdwg.mxu0
        %v429 = vadd.f32 %v394, %v426
        %v430 = vsub.f32 0.0, %v429
        %v431 = vmul.f32 %v430, 1.442695
        %v432 = vpow.pop %v431
        %v433 = vadd.f32 %v432, 1.0
        %v434 = vrcp.pop %v433
        %v435 = vmul.f32 %v433, %v434
        %v436 = vsub.f32 1.0, %v435
        %v437 = vmul.f32 %v434, %v436
        %v438 = vadd.f32 %v434, %v437
        %vm439 = vweird.f32 %v433
        %vm440 = vweird.f32 %v434
        %vm441 = vmor %vm439, %vm440
        %v442 = vsel %vm441, %v434, %v438
        %v443 = vand.u32 2147483647, %v433
        %vm444 = vcmp.eq.f32.partialorder %v443, 8.507059e+37
        %v445 = vand.u32 %v433, 2147483648
        %v446 = vor.u32 1.1754944e-38, %v445
        %v447 = vsel %vm444, %v446, %v442
        %v448 = vmul.f32 1.0, %v447
        %v449 = vtanh.pop %v429
        %v450 = vmul.f32 %v448, 0.0
        %452 = vrot.lane.b32.xlu0 %v449, 64
        %v453 = vpop.permute.xlu0 %452
        %v455 = vmul.f32 %v448, %v453
        %457 = vrot.lane.b32.xlu0 %v455, 32
        %v458 = vpop.permute.xlu0 %457
        %v460 = vadd.f32 %v450, %v458
        %v461 = vtanh.pop %v460
        %463 = vrot.lane.b32.xlu0 %v461, 64
        %v464 = vpop.permute.xlu0 %463
        %v466 = vmul.f32 %v448, %v464
        %468 = vrot.lane.b32.xlu0 %v466, 32
        %v469 = vpop.permute.xlu0 %468
        %vm471 = vcmask 253952
        %472 = vst.msk [vmem:[#allocation2] sm:$0x1] %vm471, %v469
        %v473 = vpack.c.bf16 %v466, %v466
        %475 = vrot.lane.b32.xlu0 %v473, 32
        %v476 = vpop.permute.xlu0 %475
        %v478 = vsel %vm380, %v476, 0
        %480 = vmatpush.bf16.msra.mxu0 0
        %481 = vmatpush.bf16.msra.mxu0 0
        %482 = vmatpush.bf16.msra.mxu0 0
        %483 = vmatpush.bf16.msra.mxu0 0
        %484 = vmatpush.bf16.msra.mxu0 0
        %485 = vmatpush.bf16.msra.mxu0 0
        %486 = vmatpush.bf16.msra.mxu0 %v410
        %487 = vmatpush.bf16.msra.mxu0 %v409
        %488 = vmatmul.bf16.gmra.mxu0 %v478
        %v489 = vpop.f32.mrf.mxu0
        %v490 = vadd.f32 0.0, %v489
        %v491 = vpop.f32.mrf.mxu0
        %492 = vdwg.mxu0
        %v494 = vrot.slane %v490, 7
        %v496 = vadd.f32 %v394, %v494
        %v497 = vsub.f32 0.0, %v496
        %v498 = vmul.f32 %v497, 1.442695
        %v499 = vpow.pop %v498
        %v500 = vadd.f32 %v499, 1.0
        %v501 = vrcp.pop %v500
        %v502 = vmul.f32 %v500, %v501
        %v503 = vsub.f32 1.0, %v502
        %v504 = vmul.f32 %v501, %v503
        %v505 = vadd.f32 %v501, %v504
        %vm506 = vweird.f32 %v500
        %vm507 = vweird.f32 %v501
        %vm508 = vmor %vm506, %vm507
        %v509 = vsel %vm508, %v501, %v505
        %v510 = vand.u32 2147483647, %v500
        %vm511 = vcmp.eq.f32.partialorder %v510, 8.507059e+37
        %v512 = vand.u32 %v500, 2147483648
        %v513 = vor.u32 1.1754944e-38, %v512
        %v514 = vsel %vm511, %v513, %v509
        %v515 = vmul.f32 1.0, %v514
        %v516 = vtanh.pop %v496
        %v518 = vrot.slane %v460, 7
        %v520 = vmul.f32 %v515, %v518
        %522 = vrot.lane.b32.xlu0 %v516, 64
        %v523 = vpop.permute.xlu0 %522
        %v525 = vmul.f32 %v515, %v523
        %527 = vrot.lane.b32.xlu0 %v525, 32
        %v528 = vpop.permute.xlu0 %527
        %v530 = vadd.f32 %v520, %v528
        %v531 = vtanh.pop %v530
        %533 = vrot.lane.b32.xlu0 %v531, 64
        %v534 = vpop.permute.xlu0 %533
        %v536 = vmul.f32 %v515, %v534
        %538 = vrot.lane.b32.xlu0 %v536, 32
        %v539 = vpop.permute.xlu0 %538
        %vm541 = vcmask 254977
        %542 = vst.msk [vmem:[#allocation2] sm:$0x2] %vm541, %v539
        %v543 = vpack.c.bf16 %v536, %v536
        %v545 = vshrl.u32 %v543, 16
        %547 = vrot.lane.b32.xlu0 %v545, 32
        %v548 = vpop.permute.xlu0 %547
        %v550 = vsel %vm380, %v548, 0
        %552 = vmatpush.bf16.msra.mxu0 0
        %553 = vmatpush.bf16.msra.mxu0 0
        %554 = vmatpush.bf16.msra.mxu0 0
        %555 = vmatpush.bf16.msra.mxu0 0
        %556 = vmatpush.bf16.msra.mxu0 0
        %557 = vmatpush.bf16.msra.mxu0 0
        %558 = vmatpush.bf16.msra.mxu0 %v410
        %559 = vmatpush.bf16.msra.mxu0 %v409
        %560 = vmatmul.bf16.gmra.mxu0 %v550
        %v561 = vpop.f32.mrf.mxu0
        %v562 = vadd.f32 0.0, %v561
        %v563 = vpop.f32.mrf.mxu0
        %564 = vdwg.mxu0
        %v566 = vrot.slane %v562, 6
        %v568 = vadd.f32 %v394, %v566
        %v569 = vsub.f32 0.0, %v568
        %v570 = vmul.f32 %v569, 1.442695
        %v571 = vpow.pop %v570
        %v572 = vadd.f32 %v571, 1.0
        %v573 = vrcp.pop %v572
        %v574 = vmul.f32 %v572, %v573
        %v575 = vsub.f32 1.0, %v574
        %v576 = vmul.f32 %v573, %v575
        %v577 = vadd.f32 %v573, %v576
        %vm578 = vweird.f32 %v572
        %vm579 = vweird.f32 %v573
        %vm580 = vmor %vm578, %vm579
        %v581 = vsel %vm580, %v573, %v577
        %v582 = vand.u32 2147483647, %v572
        %vm583 = vcmp.eq.f32.partialorder %v582, 8.507059e+37
        %v584 = vand.u32 %v572, 2147483648
        %v585 = vor.u32 1.1754944e-38, %v584
        %v586 = vsel %vm583, %v585, %v581
        %v587 = vmul.f32 1.0, %v586
        %v588 = vtanh.pop %v568
        %v590 = vrot.slane %v530, 7
        %v592 = vmul.f32 %v587, %v590
        %594 = vrot.lane.b32.xlu0 %v588, 64
        %v595 = vpop.permute.xlu0 %594
        %v597 = vmul.f32 %v587, %v595
        %599 = vrot.lane.b32.xlu0 %v597, 32
        %v600 = vpop.permute.xlu0 %599
        %v602 = vadd.f32 %v592, %v600
        %v603 = vtanh.pop %v602
        %605 = vrot.lane.b32.xlu0 %v603, 64
        %v606 = vpop.permute.xlu0 %605
        %v608 = vmul.f32 %v587, %v606
        %610 = vrot.lane.b32.xlu0 %v608, 32
        %v611 = vpop.permute.xlu0 %610
        %vm613 = vcmask 256002
        %614 = vst.msk [vmem:[#allocation2] sm:$0x4] %vm613, %v611
        %v615 = vpack.c.bf16 %v608, %v608
        %v617 = vrot.slane %v615, 1
        %618 = vrot.lane.b32.xlu0 %v617, 32
        %v619 = vpop.permute.xlu0 %618
        %v621 = vsel %vm380, %v619, 0
        %623 = vmatpush.bf16.msra.mxu0 0
        %624 = vmatpush.bf16.msra.mxu0 0
        %625 = vmatpush.bf16.msra.mxu0 0
        %626 = vmatpush.bf16.msra.mxu0 0
        %627 = vmatpush.bf16.msra.mxu0 0
        %628 = vmatpush.bf16.msra.mxu0 0
        %629 = vmatpush.bf16.msra.mxu0 %v410
        %630 = vmatpush.bf16.msra.mxu0 %v409
        %631 = vmatmul.bf16.gmra.mxu0 %v621
        %v632 = vpop.f32.mrf.mxu0
        %v633 = vadd.f32 0.0, %v632
        %v634 = vpop.f32.mrf.mxu0
        %635 = vdwg.mxu0
        %v637 = vrot.slane %v633, 5
        %v639 = vadd.f32 %v394, %v637
        %v640 = vsub.f32 0.0, %v639
        %v641 = vmul.f32 %v640, 1.442695
        %v642 = vpow.pop %v641
        %v643 = vadd.f32 %v642, 1.0
        %v644 = vrcp.pop %v643
        %v645 = vmul.f32 %v643, %v644
        %v646 = vsub.f32 1.0, %v645
        %v647 = vmul.f32 %v644, %v646
        %v648 = vadd.f32 %v644, %v647
        %vm649 = vweird.f32 %v643
        %vm650 = vweird.f32 %v644
        %vm651 = vmor %vm649, %vm650
        %v652 = vsel %vm651, %v644, %v648
        %v653 = vand.u32 2147483647, %v643
        %vm654 = vcmp.eq.f32.partialorder %v653, 8.507059e+37
        %v655 = vand.u32 %v643, 2147483648
        %v656 = vor.u32 1.1754944e-38, %v655
        %v657 = vsel %vm654, %v656, %v652
        %v658 = vmul.f32 1.0, %v657
        %v659 = vtanh.pop %v639
        %v661 = vrot.slane %v602, 7
        %v663 = vmul.f32 %v658, %v661
        %665 = vrot.lane.b32.xlu0 %v659, 64
        %v666 = vpop.permute.xlu0 %665
        %v668 = vmul.f32 %v658, %v666
        %670 = vrot.lane.b32.xlu0 %v668, 32
        %v671 = vpop.permute.xlu0 %670
        %v673 = vadd.f32 %v663, %v671
        %v674 = vtanh.pop %v673
        %676 = vrot.lane.b32.xlu0 %v674, 64
        %v677 = vpop.permute.xlu0 %676
        %v679 = vmul.f32 %v658, %v677
        %681 = vrot.lane.b32.xlu0 %v679, 32
        %v682 = vpop.permute.xlu0 %681
        %vm684 = vcmask 257027
        %685 = vst.msk [vmem:[#allocation2] sm:$0x8] %vm684, %v682
        %v686 = vpack.c.bf16 %v679, %v679
        %v688 = vshrl.u32 %v686, 16
        %v690 = vrot.slane %v688, 1
        %691 = vrot.lane.b32.xlu0 %v690, 32
        %v692 = vpop.permute.xlu0 %691
        %v694 = vsel %vm380, %v692, 0
        %696 = vmatpush.bf16.msra.mxu0 0
        %697 = vmatpush.bf16.msra.mxu0 0
        %698 = vmatpush.bf16.msra.mxu0 0
        %699 = vmatpush.bf16.msra.mxu0 0
        %700 = vmatpush.bf16.msra.mxu0 0
        %701 = vmatpush.bf16.msra.mxu0 0
        %702 = vmatpush.bf16.msra.mxu0 %v410
        %703 = vmatpush.bf16.msra.mxu0 %v409
        %704 = vmatmul.bf16.gmra.mxu0 %v694
        %v705 = vpop.f32.mrf.mxu0
        %v706 = vadd.f32 0.0, %v705
        %v707 = vpop.f32.mrf.mxu0
        %708 = vdwg.mxu0
        %v710 = vrot.slane %v706, 4
        %v712 = vadd.f32 %v394, %v710
        %v713 = vsub.f32 0.0, %v712
        %v714 = vmul.f32 %v713, 1.442695
        %v715 = vpow.pop %v714
        %v716 = vadd.f32 %v715, 1.0
        %v717 = vrcp.pop %v716
        %v718 = vmul.f32 %v716, %v717
        %v719 = vsub.f32 1.0, %v718
        %v720 = vmul.f32 %v717, %v719
        %v721 = vadd.f32 %v717, %v720
        %vm722 = vweird.f32 %v716
        %vm723 = vweird.f32 %v717
        %vm724 = vmor %vm722, %vm723
        %v725 = vsel %vm724, %v717, %v721
        %v726 = vand.u32 2147483647, %v716
        %vm727 = vcmp.eq.f32.partialorder %v726, 8.507059e+37
        %v728 = vand.u32 %v716, 2147483648
        %v729 = vor.u32 1.1754944e-38, %v728
        %v730 = vsel %vm727, %v729, %v725
        %v731 = vmul.f32 1.0, %v730
        %v732 = vtanh.pop %v712
        %v734 = vrot.slane %v673, 7
        %v736 = vmul.f32 %v731, %v734
        %738 = vrot.lane.b32.xlu0 %v732, 64
        %v739 = vpop.permute.xlu0 %738
        %v741 = vmul.f32 %v731, %v739
        %743 = vrot.lane.b32.xlu0 %v741, 32
        %v744 = vpop.permute.xlu0 %743
        %v746 = vadd.f32 %v736, %v744
        %v747 = vtanh.pop %v746
        %749 = vrot.lane.b32.xlu0 %v747, 64
        %v750 = vpop.permute.xlu0 %749
        %v752 = vmul.f32 %v731, %v750
        %754 = vrot.lane.b32.xlu0 %v752, 32
        %v755 = vpop.permute.xlu0 %754
        %vm757 = vcmask 258052
        %758 = vst.msk [vmem:[#allocation2] sm:$0x10] %vm757, %v755
        %v759 = vpack.c.bf16 %v752, %v752
        %v761 = vrot.slane %v759, 2
        %762 = vrot.lane.b32.xlu0 %v761, 32
        %v763 = vpop.permute.xlu0 %762
        %v765 = vsel %vm380, %v763, 0
        %767 = vmatpush.bf16.msra.mxu0 0
        %768 = vmatpush.bf16.msra.mxu0 0
        %769 = vmatpush.bf16.msra.mxu0 0
        %770 = vmatpush.bf16.msra.mxu0 0
        %771 = vmatpush.bf16.msra.mxu0 0
        %772 = vmatpush.bf16.msra.mxu0 0
        %773 = vmatpush.bf16.msra.mxu0 %v410
        %774 = vmatpush.bf16.msra.mxu0 %v409
        %775 = vmatmul.bf16.gmra.mxu0 %v765
        %v776 = vpop.f32.mrf.mxu0
        %v777 = vadd.f32 0.0, %v776
        %v778 = vpop.f32.mrf.mxu0
        %779 = vdwg.mxu0
        %v781 = vrot.slane %v777, 3
        %v783 = vadd.f32 %v394, %v781
        %v784 = vsub.f32 0.0, %v783
        %v785 = vmul.f32 %v784, 1.442695
        %v786 = vpow.pop %v785
        %v787 = vadd.f32 %v786, 1.0
        %v788 = vrcp.pop %v787
        %v789 = vmul.f32 %v787, %v788
        %v790 = vsub.f32 1.0, %v789
        %v791 = vmul.f32 %v788, %v790
        %v792 = vadd.f32 %v788, %v791
        %vm793 = vweird.f32 %v787
        %vm794 = vweird.f32 %v788
        %vm795 = vmor %vm793, %vm794
        %v796 = vsel %vm795, %v788, %v792
        %v797 = vand.u32 2147483647, %v787
        %vm798 = vcmp.eq.f32.partialorder %v797, 8.507059e+37
        %v799 = vand.u32 %v787, 2147483648
        %v800 = vor.u32 1.1754944e-38, %v799
        %v801 = vsel %vm798, %v800, %v796
        %v802 = vmul.f32 1.0, %v801
        %v803 = vtanh.pop %v783
        %v805 = vrot.slane %v746, 7
        %v807 = vmul.f32 %v802, %v805
        %809 = vrot.lane.b32.xlu0 %v803, 64
        %v810 = vpop.permute.xlu0 %809
        %v812 = vmul.f32 %v802, %v810
        %814 = vrot.lane.b32.xlu0 %v812, 32
        %v815 = vpop.permute.xlu0 %814
        %v817 = vadd.f32 %v807, %v815
        %v818 = vtanh.pop %v817
        %820 = vrot.lane.b32.xlu0 %v818, 64
        %v821 = vpop.permute.xlu0 %820
        %v823 = vmul.f32 %v802, %v821
        %825 = vrot.lane.b32.xlu0 %v823, 32
        %v826 = vpop.permute.xlu0 %825
        %vm828 = vcmask 259077
        %829 = vst.msk [vmem:[#allocation2] sm:$0x20] %vm828, %v826
        %v830 = vpack.c.bf16 %v823, %v823
        %v832 = vshrl.u32 %v830, 16
        %v834 = vrot.slane %v832, 2
        %835 = vrot.lane.b32.xlu0 %v834, 32
        %v836 = vpop.permute.xlu0 %835
        %v838 = vsel %vm380, %v836, 0
        %840 = vmatpush.bf16.msra.mxu0 0
        %841 = vmatpush.bf16.msra.mxu0 0
        %842 = vmatpush.bf16.msra.mxu0 0
        %843 = vmatpush.bf16.msra.mxu0 0
        %844 = vmatpush.bf16.msra.mxu0 0
        %845 = vmatpush.bf16.msra.mxu0 0
        %846 = vmatpush.bf16.msra.mxu0 %v410
        %847 = vmatpush.bf16.msra.mxu0 %v409
        %848 = vmatmul.bf16.gmra.mxu0 %v838
        %v849 = vpop.f32.mrf.mxu0
        %v850 = vadd.f32 0.0, %v849
        %v851 = vpop.f32.mrf.mxu0
        %852 = vdwg.mxu0
        %v854 = vrot.slane %v850, 2
        %v856 = vadd.f32 %v394, %v854
        %v857 = vsub.f32 0.0, %v856
        %v858 = vmul.f32 %v857, 1.442695
        %v859 = vpow.pop %v858
        %v860 = vadd.f32 %v859, 1.0
        %v861 = vrcp.pop %v860
        %v862 = vmul.f32 %v860, %v861
        %v863 = vsub.f32 1.0, %v862
        %v864 = vmul.f32 %v861, %v863
        %v865 = vadd.f32 %v861, %v864
        %vm866 = vweird.f32 %v860
        %vm867 = vweird.f32 %v861
        %vm868 = vmor %vm866, %vm867
        %v869 = vsel %vm868, %v861, %v865
        %v870 = vand.u32 2147483647, %v860
        %vm871 = vcmp.eq.f32.partialorder %v870, 8.507059e+37
        %v872 = vand.u32 %v860, 2147483648
        %v873 = vor.u32 1.1754944e-38, %v872
        %v874 = vsel %vm871, %v873, %v869
        %v875 = vmul.f32 1.0, %v874
        %v876 = vtanh.pop %v856
        %v878 = vrot.slane %v817, 7
        %v880 = vmul.f32 %v875, %v878
        %882 = vrot.lane.b32.xlu0 %v876, 64
        %v883 = vpop.permute.xlu0 %882
        %v885 = vmul.f32 %v875, %v883
        %887 = vrot.lane.b32.xlu0 %v885, 32
        %v888 = vpop.permute.xlu0 %887
        %v890 = vadd.f32 %v880, %v888
        %v891 = vtanh.pop %v890
        %893 = vrot.lane.b32.xlu0 %v891, 64
        %v894 = vpop.permute.xlu0 %893
        %v896 = vmul.f32 %v875, %v894
        %898 = vrot.lane.b32.xlu0 %v896, 32
        %v899 = vpop.permute.xlu0 %898
        %vm901 = vcmask 260102
        %902 = vst.msk [vmem:[#allocation2] sm:$0x40] %vm901, %v899
        %v903 = vpack.c.bf16 %v896, %v896
        %v905 = vrot.slane %v903, 3
        %906 = vrot.lane.b32.xlu0 %v905, 32
        %v907 = vpop.permute.xlu0 %906
        %v909 = vsel %vm380, %v907, 0
        %911 = vmatpush.bf16.msra.mxu0 0
        %912 = vmatpush.bf16.msra.mxu0 0
        %913 = vmatpush.bf16.msra.mxu0 0
        %914 = vmatpush.bf16.msra.mxu0 0
        %915 = vmatpush.bf16.msra.mxu0 0
        %916 = vmatpush.bf16.msra.mxu0 0
        %917 = vmatpush.bf16.msra.mxu0 %v410
        %918 = vmatpush.bf16.msra.mxu0 %v409
        %919 = vmatmul.bf16.gmra.mxu0 %v909
        %v920 = vpop.f32.mrf.mxu0
        %v921 = vadd.f32 0.0, %v920
        %v922 = vpop.f32.mrf.mxu0
        %923 = vdwg.mxu0
        %v925 = vrot.slane %v921, 1
        %v927 = vadd.f32 %v394, %v925
        %v928 = vsub.f32 0.0, %v927
        %v929 = vmul.f32 %v928, 1.442695
        %v930 = vpow.pop %v929
        %v931 = vadd.f32 %v930, 1.0
        %v932 = vrcp.pop %v931
        %v933 = vmul.f32 %v931, %v932
        %v934 = vsub.f32 1.0, %v933
        %v935 = vmul.f32 %v932, %v934
        %v936 = vadd.f32 %v932, %v935
        %vm937 = vweird.f32 %v931
        %vm938 = vweird.f32 %v932
        %vm939 = vmor %vm937, %vm938
        %v940 = vsel %vm939, %v932, %v936
        %v941 = vand.u32 2147483647, %v931
        %vm942 = vcmp.eq.f32.partialorder %v941, 8.507059e+37
        %v943 = vand.u32 %v931, 2147483648
        %v944 = vor.u32 1.1754944e-38, %v943
        %v945 = vsel %vm942, %v944, %v940
        %v946 = vmul.f32 1.0, %v945
        %v947 = vtanh.pop %v927
        %v949 = vrot.slane %v890, 7
        %v951 = vmul.f32 %v946, %v949
        %953 = vrot.lane.b32.xlu0 %v947, 64
        %v954 = vpop.permute.xlu0 %953
        %v956 = vmul.f32 %v946, %v954
        %958 = vrot.lane.b32.xlu0 %v956, 32
        %v959 = vpop.permute.xlu0 %958
        %v961 = vadd.f32 %v951, %v959
        %v962 = vtanh.pop %v961
        %964 = vrot.lane.b32.xlu0 %v962, 64
        %v965 = vpop.permute.xlu0 %964
        %v967 = vmul.f32 %v946, %v965
        %969 = vrot.lane.b32.xlu0 %v967, 32
        %v970 = vpop.permute.xlu0 %969
        %vm972 = vcmask 261127
        %973 = vst.msk [vmem:[#allocation2] sm:$0x80] %vm972, %v970
        %v974 = vld [vmem:[#allocation2] sm:$0xff]
        %v975 = vpack.c.bf16 %v974, %v974
        %v976 = vld [vmem:[#allocation9] sm:$0xf]
        %v977 = vld [vmem:[#allocation9 + $0x4] sm:$0xf]
        %v978 = vld [vmem:[#allocation9 + $0x8] sm:$0xf]
        %v979 = vld [vmem:[#allocation9 + $0xc] sm:$0xf]
        %v980 = vld [vmem:[%s4] sm:$0x1]
        %v982 = vperm.slane %v980, 0
        %v988 = vunpack.c.l.b16 %v976
        %v989 = vunpack.c.l.b16 %v977
        %v990 = vunpack.c.l.b16 %v978
        %v991 = vunpack.c.l.b16 %v979
        %v992 = vpack.c.b16 %v989, %v988
        %v993 = vpack.c.b16 %v991, %v990
        %v997 = vsel %vm380, %v975, 0
        %999 = vmatpush.bf16.msra.mxu0 0
        %1000 = vmatpush.bf16.msra.mxu0 0
        %1001 = vmatpush.bf16.msra.mxu0 0
        %1002 = vmatpush.bf16.msra.mxu0 0
        %1003 = vmatpush.bf16.msra.mxu0 0
        %1004 = vmatpush.bf16.msra.mxu0 0
        %1005 = vmatpush.bf16.msra.mxu0 %v993
        %1006 = vmatpush.bf16.msra.mxu0 %v992
        %1007 = vmatmul.bf16.gmra.mxu0 %v997
        %v1008 = vpop.f32.mrf.mxu0
        %v1009 = vadd.f32 %v982, %v1008
        %v1010 = vpop.f32.mrf.mxu0
        %1011 = vdwg.mxu0
        %v1012 = vpack.c.bf16 %v1009, %v1009
        %v1013 = vld [vmem:[#allocation11] sm:$0xf]
        %v1014 = vld [vmem:[#allocation11 + $0x4] sm:$0xf]
        %v1015 = vld [vmem:[#allocation11 + $0x8] sm:$0xf]
        %v1016 = vld [vmem:[#allocation11 + $0xc] sm:$0xf]
        %v1017 = vld [vmem:[#allocation11 + $0x10] sm:$0xf]
        %v1018 = vld [vmem:[#allocation11 + $0x14] sm:$0xf]
        %v1019 = vld [vmem:[#allocation11 + $0x18] sm:$0xf]
        %v1020 = vld [vmem:[#allocation11 + $0x1c] sm:$0xf]
        %v1021 = vld [vmem:[#allocation11 + $0x20] sm:$0xf]
        %v1022 = vld [vmem:[#allocation11 + $0x24] sm:$0xf]
        %v1023 = vld [vmem:[#allocation11 + $0x28] sm:$0xf]
        %v1024 = vld [vmem:[#allocation11 + $0x2c] sm:$0xf]
        %v1025 = vld [vmem:[#allocation11 + $0x30] sm:$0xf]
        %v1026 = vld [vmem:[#allocation11 + $0x34] sm:$0xf]
        %v1027 = vld [vmem:[#allocation11 + $0x38] sm:$0xf]
        %v1028 = vld [vmem:[#allocation11 + $0x3c] sm:$0xf]
        %v1029 = vld [vmem:[%s6] sm:$0x1]
        %v1031 = vperm.slane %v1029, 0
        %v1049 = vunpack.c.l.b16 %v1013
        %v1050 = vunpack.c.l.b16 %v1014
        %v1051 = vunpack.c.l.b16 %v1015
        %v1052 = vunpack.c.l.b16 %v1016
        %v1053 = vunpack.c.l.b16 %v1017
        %v1054 = vunpack.c.l.b16 %v1018
        %v1055 = vunpack.c.l.b16 %v1019
        %v1056 = vunpack.c.l.b16 %v1020
        %v1057 = vunpack.c.l.b16 %v1021
        %v1058 = vunpack.c.l.b16 %v1022
        %v1059 = vunpack.c.l.b16 %v1023
        %v1060 = vunpack.c.l.b16 %v1024
        %v1061 = vunpack.c.l.b16 %v1025
        %v1062 = vunpack.c.l.b16 %v1026
        %v1063 = vunpack.c.l.b16 %v1027
        %v1064 = vunpack.c.l.b16 %v1028
        %v1065 = vpack.c.b16 %v1050, %v1049
        %v1066 = vpack.c.b16 %v1052, %v1051
        %v1067 = vpack.c.b16 %v1054, %v1053
        %v1068 = vpack.c.b16 %v1056, %v1055
        %v1069 = vpack.c.b16 %v1058, %v1057
        %v1070 = vpack.c.b16 %v1060, %v1059
        %v1071 = vpack.c.b16 %v1062, %v1061
        %v1072 = vpack.c.b16 %v1064, %v1063
        %1081 = vmatpush.bf16.msra.mxu0 %v1072
        %1082 = vmatpush.bf16.msra.mxu0 %v1071
        %1083 = vmatpush.bf16.msra.mxu0 %v1070
        %1084 = vmatpush.bf16.msra.mxu0 %v1069
        %1085 = vmatpush.bf16.msra.mxu0 %v1068
        %1086 = vmatpush.bf16.msra.mxu0 %v1067
        %1087 = vmatpush.bf16.msra.mxu0 %v1066
        %1088 = vmatpush.bf16.msra.mxu0 %v1065
        %1089 = vmatmul.bf16.gmra.mxu0 %v1012
        %v1090 = vpop.f32.mrf.mxu0
        %v1091 = vadd.f32 %v1031, %v1090
        %v1092 = vpop.f32.mrf.mxu0
        %1093 = vdwg.mxu0
        %1094 = vst [vmem:[%s361] sm:$0xff] %v1091
        %s1095 = sand.u32 %s186, 1
        %s1096 = scalar_lea.sflag [#allocation5], %s1095
        %s1097 = sand.u32 %s186, 1
        %s1098 = smul.addr %s1097, 8
        %s1099 = scalar_lea.vmem [#allocation12], %s1098
        // Predicated region
        $region69: #{tpu_custom_call.1} parent=47 // pred_check
          %p1100 = pneg %p196
        $region70: #{tpu_custom_call.1} parent=47 // pred_check_branch
          %1102 = sbr.rel (%p1100) target = $region72
        $region71: #{tpu_custom_call.1} parent=47 // pred_region
          %1104 = vsyncadd %s1096, 0
          %s1105 = smul.addr %s26, 8
          %s1106 = scalar_lea.hbm %s7, %s1105
          %s1108 = sshll.u32 %s1099, 4
          %s1109 = int_to_ptr.vmem [resolvable:$true] %s1108
          %s1110 = sshll.u32 %s1106, 4
          %s1111 = int_to_ptr.hbm [resolvable:$true] %s1110
          %1113 = dma.vmem_to_hbm [thread:$0]  %s1109, 128, %s1111, %s1096
        $region72: #{tpu_custom_call.1} parent=47 // pred_fallthru
          _
      $region48: #{tpu_custom_call.1} parent=5 // pred_fallthru
        _
      %p1114 = scmp.le.s32.totalorder 2, %s21
      // Predicated region
      $region73: #{tpu_custom_call.1} parent=5 // pred_check
        %p1115 = pneg %p1114
      $region74: #{tpu_custom_call.1} parent=5 // pred_check_branch
        %1117 = sbr.rel (%p1115) target = $region76
      $region75: #{tpu_custom_call.1} parent=5 // pred_region
        %s1118 = ssub.s32 %s21, 2
        // Predicated region
        $region77: #{tpu_custom_call.1} parent=75 // pred_check
          %p1119 = pneg %p202
        $region78: #{tpu_custom_call.1} parent=75 // pred_check_branch
          %1121 = sbr.rel (%p1119) target = $region80
        $region79: #{tpu_custom_call.1} parent=75 // pred_region
          %s1122 = sand.u32 %s187, 1
          %s1123 = scalar_lea.sflag [#allocation5], %s1122
          %s1124 = sand.u32 %s187, 1
          %s1125 = smul.addr %s1124, 8
          %s1126 = scalar_lea.vmem [#allocation12], %s1125
          %1128 = dma.done %s1123, 128
        $region80: #{tpu_custom_call.1} parent=75 // pred_fallthru
          _
      $region76: #{tpu_custom_call.1} parent=5 // pred_fallthru
        _
    $region6: #{tpu_custom_call.1} parent=1 // loop_footer
      %s25 = sadd.s32 1, %s21
    $region7: #{tpu_custom_call.1} parent=1 // loop_footer_branch
      %20 = sbr.rel target = $region3
    $region8: #{tpu_custom_call.1} parent=1 // loop_exit
      _
    %1129 = vsyncpa [#allocation4], 1
    %s1130 = scalar_lea.sflag [#allocation4], 1
    %1131 = vsyncpa %s1130, 1
    %1132 = vsyncpa [#allocation7], 1
    %1133 = vsyncpa [#allocation10], 1
    %1134 = vsyncpa [#allocation5], 1
    %s1135 = scalar_lea.sflag [#allocation5], 1
    %1136 = vsyncpa %s1135, 1

</llo_original>
